<compile_context>
chip_gen: v7x
topology: tpu7x:2x2x1
jax: 0.10.0
libtpu: 0.0.40
codegen_flags: <defaults>
</compile_context>

<pallas_src>
import functools

import jax
import jax.numpy as jnp
from jax.experimental import pallas as pl
from jax.experimental.pallas import tpu as pltpu


def _lse_kernel(coords_ref, nb_ref, feat_ref, rep_ref,
                wc_ref, wn_ref, wd_ref, wcl_ref, b0_ref, w1_ref, b1_ref,
                x_ref):
    """One (batch, point-tile) grid step; everything channel-first / lane-dense.

    coords_ref: (1, 6, TN)     center xyz+lab, channel-first
    nb_ref:     (1, 6, TN*K)   gathered neighbor xyz+lab, channel-first
    feat_ref:   (1, d, TN)     per-point features, channel-first
    rep_ref:    (RC, RC*K)     0/1 lane-repeat matrix (column n -> lanes n*K..n*K+K-1)
    wc_ref:  (H, 6)   folded w0, center rows   (Wc + Wr).T
    wn_ref:  (H, 6)   folded w0, neighbor rows (Wn - Wr).T
    wd_ref:  (H, 1)   folded w0, distance row
    wcl_ref: (H, 1)   folded w0, color-diff row
    b0_ref:  (H, 1)   folded bias 0
    w1_ref:  (d, H)   folded w1 (transposed)
    b1_ref:  (d, 1)   folded bias 1
    x_ref:   (1, 2d, TN*K)  NCHW-flattened output tile ([ste ; broadcast features])
    """
    d = feat_ref.shape[1]
    tn = coords_ref.shape[-1]
    rc = rep_ref.shape[0]
    rep = rep_ref[...]

    def repeat_k(x):
        # (C, tn) -> (C, tn*K) with every column repeated K times (n-major, k-minor).
        # Done as x @ rep on the MXU: rep columns are one-hot, so this is exact and
        # guaranteed to lower; it rides the otherwise-idle MXU slot.
        if tn == rc:
            return jnp.dot(x, rep, preferred_element_type=jnp.float32)
        parts = [jnp.dot(x[:, j * rc:(j + 1) * rc], rep,
                         preferred_element_type=jnp.float32)
                 for j in range(tn // rc)]
        return jnp.concatenate(parts, axis=1)

    center_b = repeat_k(coords_ref[0])                       # (6, TN*K)
    nb = nb_ref[0]                                           # (6, TN*K)
    rel = center_b - nb                                      # (6, TN*K)

    # Distances from explicit per-channel rows: no narrow-lane reductions.
    rel_dis = jnp.sqrt(rel[0:1] * rel[0:1] + rel[1:2] * rel[1:2]
                       + rel[2:3] * rel[2:3])                # (1, TN*K)
    col_dif = jnp.sqrt(rel[3:4] * rel[3:4] + rel[4:5] * rel[4:5]
                       + rel[5:6] * rel[5:6])                # (1, TN*K)

    # --- mlp0 (folded conv+BN), decomposed, channel-first ---
    h = (jnp.dot(wc_ref[...], center_b, preferred_element_type=jnp.float32)
         + jnp.dot(wn_ref[...], nb, preferred_element_type=jnp.float32)
         + wd_ref[...] * rel_dis
         + wcl_ref[...] * col_dif
         + b0_ref[...])
    h = jnp.maximum(h, 0.0)                                  # (H, TN*K)

    # --- mlp1 (folded conv+BN) + ReLU ---
    ste = jnp.dot(w1_ref[...], h, preferred_element_type=jnp.float32) + b1_ref[...]
    ste = jnp.maximum(ste, 0.0)                              # (d, TN*K)

    # feature half of x: per-point features repeated over K (lane repeat)
    feat_b = repeat_k(feat_ref[0])                           # (d, TN*K)

    # Two lane-dense stores, already in the flattened NCHW layout.
    x_ref[0, :d, :] = ste.astype(x_ref.dtype)
    x_ref[0, d:, :] = feat_b.astype(x_ref.dtype)


def _fold_conv_bn(w, b, gamma, beta, mean, var, eps=1e-6):
    """Fold 1x1 Conv2d (w: (C_out, C_in)) + BatchNorm2d (eval, eps=1e-6 as in
    SharedMLP) into matmul form: y = x @ W_eff + b_eff == BN(Conv(x))."""
    scale = gamma / jnp.sqrt(var + eps)                 # (C_out,)
    w_eff = (w * scale[:, None]).T                      # (C_in, C_out)
    b_eff = (scale * (b - mean) + beta)[None, :]        # (1, C_out)
    return w_eff.astype(jnp.float32), b_eff.astype(jnp.float32)


def _pick_tile_n(N, K, d, target_bytes=20 * 1024 * 1024, rep_chunk=128):
    """Largest TPU-friendly point tile TN: divides N, is a multiple of 128 (or
    equals N), and whose (8,128)-padded, double-buffered fp32 working set fits
    target_bytes (sized for v7x's 64 MiB VMEM).  Fails loudly otherwise."""
    def pad8(c):
        return -(-c // 8) * 8

    # double-buffered, padded input + output blocks per point
    per_point = 4 * 2 * (pad8(6) + pad8(6) * K + pad8(d) + pad8(2 * d) * K)
    # rough single-buffered in-kernel intermediates (center_b, rel, h, ste, feat_b)
    per_point += 4 * K * (2 * pad8(6) + pad8(16) + 2 * pad8(d))
    # repeat matrix (double-buffered) + folded weights + slop
    fixed = 2 * 4 * rep_chunk * rep_chunk * K + (1 << 20)

    cap = max(0, target_bytes - fixed) // per_point
    if N <= cap:
        return N                                    # whole-axis blocks are always legal
    best = 0
    t = 128
    while t <= cap:
        if N % t == 0:
            best = t
        t += 128
    if best == 0:
        raise ValueError(
            f"No lane-aligned point tile (multiple of 128 dividing N={N}) fits the "
            f"{target_bytes}-byte VMEM budget; pass tn explicitly.")
    return best


def local_spatial_encoding(coords, raw_points, features, neigh_idx, params, d,
                           tn=None, out_dtype=jnp.float32,
                           vmem_limit_bytes=32 * 1024 * 1024):
    """JAX wrapper reproducing LocalSpatialEncoding.forward (whether_cal=1, use_rgb=True).

    coords:     (B, N, 6)  float32
    raw_points: (B, M, 6)  float32
    features:   (B, d, N, 1) float32  (PyTorch layout)
    neigh_idx:  (B, N, K)  int32
    Returns (x, ste_feature) in PyTorch layout: (B, 2d, N, K), (B, d, N, K).
    out_dtype=jnp.bfloat16 halves output HBM traffic if downstream tolerates it.
    """
    B, N, K = neigh_idx.shape
    if tn is None:
        tn = _pick_tile_n(N, K, d)
    else:
        if N % tn != 0:
            raise ValueError(f"tn={tn} must divide N={N}")
        if tn % 128 != 0 and tn != N:
            raise ValueError(f"tn={tn} must be a multiple of 128 (or equal N)")
    rc = 128 if tn % 128 == 0 else tn        # lane-repeat chunk; divides tn

    # --- glue: channel-first views (tiny, per-point tensors) ---
    coords_cf = jnp.transpose(coords, (0, 2, 1))             # (B, 6, N)
    feat_cf = features[..., 0]                                # (B, d, N)

    # --- glue: gather neighbors directly channel-first -> (B, 6, N*K) ---
    raw_cf = jnp.transpose(raw_points, (0, 2, 1))             # (B, 6, M)
    neighbors_cf = jax.vmap(
        lambda rp, i: jnp.take(rp, i, axis=1))(raw_cf, neigh_idx.reshape(B, N * K))

    # --- glue: fold conv+bn, decompose w0 row-blocks, transpose channel-first ---
    w0_eff, b0_eff = _fold_conv_bn(params["w0"], params["b0"], params["g0"],
                                   params["be0"], params["m0"], params["v0"])
    w1_eff, b1_eff = _fold_conv_bn(params["w1"], params["b1"], params["g1"],
                                   params["be1"], params["m1"], params["v1"])
    wc_t = (w0_eff[0:6] + w0_eff[12:18]).T      # (H, 6)  center rows absorb +rel rows
    wn_t = (w0_eff[6:12] - w0_eff[12:18]).T     # (H, 6)  neighbor rows absorb -rel rows
    wd_t = w0_eff[18:19].T                      # (H, 1)
    wcl_t = w0_eff[19:20].T                     # (H, 1)
    b0_t = b0_eff.T                             # (H, 1)
    w1_t = w1_eff.T                             # (d, H)
    b1_t = b1_eff.T                             # (d, 1)
    hidden = wc_t.shape[0]

    # --- glue: 0/1 lane-repeat matrix (exact MXU broadcast over K) ---
    rep = (jnp.arange(rc)[:, None] == (jnp.arange(rc * K)[None, :] // K)
           ).astype(jnp.float32)                              # (rc, rc*K)

    grid = (B, N // tn)
    x_flat = pl.pallas_call(
        _lse_kernel,
        out_shape=jax.ShapeDtypeStruct((B, 2 * d, N * K), out_dtype),
        grid_spec=pltpu.PrefetchScalarGridSpec(
            num_scalar_prefetch=0,
            grid=grid,
            in_specs=[
                pl.BlockSpec((1, 6, tn), lambda b, n: (b, 0, n)),
                pl.BlockSpec((1, 6, tn * K), lambda b, n: (b, 0, n)),
                pl.BlockSpec((1, d, tn), lambda b, n: (b, 0, n)),
                pl.BlockSpec((rc, rc * K), lambda b, n: (0, 0)),
                pl.BlockSpec((hidden, 6), lambda b, n: (0, 0)),
                pl.BlockSpec((hidden, 6), lambda b, n: (0, 0)),
                pl.BlockSpec((hidden, 1), lambda b, n: (0, 0)),
                pl.BlockSpec((hidden, 1), lambda b, n: (0, 0)),
                pl.BlockSpec((hidden, 1), lambda b, n: (0, 0)),
                pl.BlockSpec((d, hidden), lambda b, n: (0, 0)),
                pl.BlockSpec((d, 1), lambda b, n: (0, 0)),
            ],
            out_specs=pl.BlockSpec((1, 2 * d, tn * K), lambda b, n: (b, 0, n)),
        ),
        compiler_params=pltpu.CompilerParams(
            dimension_semantics=("parallel", "parallel"),
            vmem_limit_bytes=vmem_limit_bytes),
    )(coords_cf, neighbors_cf, feat_cf, rep,
      wc_t, wn_t, wd_t, wcl_t, b0_t, w1_t, b1_t)

    # free contiguous reshape back to PyTorch NCHW; ste is the contiguous prefix of x
    x = x_flat.reshape(B, 2 * d, N, K)
    ste_feature = x[:, :d]
    return x, ste_feature


def _reference(coords, raw_points, features, neigh_idx, params, d):
    """Pure-JAX reference mirroring the PyTorch forward (use_rgb=True, BN eval)."""
    B, N, K = neigh_idx.shape
    neighbors = jax.vmap(lambda rp, i: rp[i])(raw_points, neigh_idx)   # (B,N,K,6)
    center = jnp.broadcast_to(coords[:, :, None, :], neighbors.shape)
    rel = center - neighbors
    rel_dis = jnp.sqrt(jnp.sum(rel[..., :3] ** 2, axis=-1, keepdims=True))
    col = jnp.sqrt(jnp.sum(rel[..., 3:] ** 2, axis=-1, keepdims=True))
    c20 = jnp.concatenate([center, neighbors, rel, rel_dis, col], axis=-1)
    w0_eff, b0_eff = _fold_conv_bn(params["w0"], params["b0"], params["g0"],
                                   params["be0"], params["m0"], params["v0"])
    w1_eff, b1_eff = _fold_conv_bn(params["w1"], params["b1"], params["g1"],
                                   params["be1"], params["m1"], params["v1"])
    h = jnp.maximum(c20 @ w0_eff + b0_eff, 0.0)
    ste = jnp.maximum(h @ w1_eff + b1_eff, 0.0)                     # (B,N,K,d)
    feat = jnp.broadcast_to(jnp.transpose(features[..., 0], (0, 2, 1))[:, :, None, :],
                            (B, N, K, d))
    x = jnp.concatenate([ste, feat], axis=-1)
    return jnp.transpose(x, (0, 3, 1, 2)), jnp.transpose(ste, (0, 3, 1, 2))


if __name__ == "__main__":
    # Small shapes consistent with the module: B batches, N points, K neighbors,
    # M raw points, d output/feature channels.  tn=128 exercises the N-tiling
    # path (grid = (B, N//tn) = (2, 2)).
    B, N, K, M, d = 2, 256, 8, 512, 16

    key = jax.random.PRNGKey(0)
    ks = jax.random.split(key, 12)

    coords = jax.random.normal(ks[0], (B, N, 6), dtype=jnp.float32)
    raw_points = jax.random.normal(ks[1], (B, M, 6), dtype=jnp.float32)
    features = jax.random.normal(ks[2], (B, d, N, 1), dtype=jnp.float32)
    neigh_idx = jax.random.randint(ks[3], (B, N, K), 0, M, dtype=jnp.int32)

    # Deterministic parameter init (Conv2d 1x1 weights + BatchNorm2d running stats).
    params = {
        "w0": 0.1 * jax.random.normal(ks[4], (16, 20), dtype=jnp.float32),
        "b0": 0.1 * jax.random.normal(ks[5], (16,), dtype=jnp.float32),
        "g0": 1.0 + 0.05 * jax.random.normal(ks[6], (16,), dtype=jnp.float32),
        "be0": 0.05 * jax.random.normal(ks[7], (16,), dtype=jnp.float32),
        "m0": jnp.zeros((16,), jnp.float32),
        "v0": jnp.ones((16,), jnp.float32),
        "w1": 0.1 * jax.random.normal(ks[8], (d, 16), dtype=jnp.float32),
        "b1": 0.1 * jax.random.normal(ks[9], (d,), dtype=jnp.float32),
        "g1": 1.0 + 0.05 * jax.random.normal(ks[10], (d,), dtype=jnp.float32),
        "be1": 0.05 * jax.random.normal(ks[11], (d,), dtype=jnp.float32),
        "m1": jnp.zeros((d,), jnp.float32),
        "v1": jnp.ones((d,), jnp.float32),
    }

    run = jax.jit(functools.partial(local_spatial_encoding, d=d, tn=128))
    x, ste = run(coords, raw_points, features, neigh_idx, params)
    jax.block_until_ready((x, ste))

    x_ref, ste_ref = _reference(coords, raw_points, features, neigh_idx, params, d)
    assert x.shape == (B, 2 * d, N, K) and ste.shape == (B, d, N, K)
    assert jnp.allclose(x, x_ref, rtol=1e-4, atol=1e-4)
    assert jnp.allclose(ste, ste_ref, rtol=1e-4, atol=1e-4)

    print("KERNEL_OK")
</pallas_src>

<mosaic_0001>
module attributes {stable_mosaic.version = 11 : i64} {
  func.func @_lse_kernel(%arg0: i32, %arg1: i32, %arg2: memref<1x6x128xf32, #tpu.memory_space<vmem>>, %arg3: memref<1x6x1024xf32, #tpu.memory_space<vmem>>, %arg4: memref<1x16x128xf32, #tpu.memory_space<vmem>>, %arg5: memref<128x1024xf32, #tpu.memory_space<vmem>>, %arg6: memref<16x6xf32, #tpu.memory_space<vmem>>, %arg7: memref<16x6xf32, #tpu.memory_space<vmem>>, %arg8: memref<16x1xf32, #tpu.memory_space<vmem>>, %arg9: memref<16x1xf32, #tpu.memory_space<vmem>>, %arg10: memref<16x1xf32, #tpu.memory_space<vmem>>, %arg11: memref<16x16xf32, #tpu.memory_space<vmem>>, %arg12: memref<16x1xf32, #tpu.memory_space<vmem>>, %arg13: memref<1x32x1024xf32, #tpu.memory_space<vmem>>) attributes {dimension_semantics = [#tpu.dimension_semantics<parallel>, #tpu.dimension_semantics<parallel>], iteration_bounds = array<i64: 2, 2>, scalar_prefetch = 0 : i64, scratch_operands = 0 : i64, tpu.core_type = #tpu.core_type<tc>, window_params = [{transform_indices = @transform_0, window_bounds = array<i64: 1, 6, 128>}, {transform_indices = @transform_1, window_bounds = array<i64: 1, 6, 1024>}, {transform_indices = @transform_2, window_bounds = array<i64: 1, 16, 128>}, {pipeline_mode = #tpu.pipeline_mode<synchronous>, transform_indices = @transform_3, window_bounds = array<i64: 128, 1024>}, {pipeline_mode = #tpu.pipeline_mode<synchronous>, transform_indices = @transform_4, window_bounds = array<i64: 16, 6>}, {pipeline_mode = #tpu.pipeline_mode<synchronous>, transform_indices = @transform_5, window_bounds = array<i64: 16, 6>}, {pipeline_mode = #tpu.pipeline_mode<synchronous>, transform_indices = @transform_6, window_bounds = array<i64: 16, 1>}, {pipeline_mode = #tpu.pipeline_mode<synchronous>, transform_indices = @transform_7, window_bounds = array<i64: 16, 1>}, {pipeline_mode = #tpu.pipeline_mode<synchronous>, transform_indices = @transform_8, window_bounds = array<i64: 16, 1>}, {pipeline_mode = #tpu.pipeline_mode<synchronous>, transform_indices = @transform_9, window_bounds = array<i64: 16, 16>}, {pipeline_mode = #tpu.pipeline_mode<synchronous>, transform_indices = @transform_10, window_bounds = array<i64: 16, 1>}, {transform_indices = @transform_11, window_bounds = array<i64: 1, 32, 1024>}]} {
    %c0 = arith.constant 0 : index
    %c0_0 = arith.constant 0 : index
    %0 = vector.load %arg5[%c0, %c0_0] : memref<128x1024xf32, #tpu.memory_space<vmem>>, vector<128x1024xf32>
    %c0_1 = arith.constant 0 : index
    %c0_2 = arith.constant 0 : index
    %c0_3 = arith.constant 0 : index
    %1 = vector.load %arg2[%c0_1, %c0_2, %c0_3] : memref<1x6x128xf32, #tpu.memory_space<vmem>>, vector<1x6x128xf32>
    %2 = vector.shape_cast %1 : vector<1x6x128xf32> to vector<6x128xf32>
    %cst = arith.constant dense<0.000000e+00> : vector<6x1024xf32>
    %3 = tpu.matmul %2, %0, %cst {dimension_numbers = #tpu.dot_dimension_numbers<[1], [0], [0], [1], [0, 0, 1, 1], [], []>} : vector<6x128xf32>, vector<128x1024xf32>, vector<6x1024xf32> -> vector<6x1024xf32>
    %c0_4 = arith.constant 0 : index
    %c0_5 = arith.constant 0 : index
    %c0_6 = arith.constant 0 : index
    %4 = vector.load %arg3[%c0_4, %c0_5, %c0_6] : memref<1x6x1024xf32, #tpu.memory_space<vmem>>, vector<1x6x1024xf32>
    %5 = vector.shape_cast %4 : vector<1x6x1024xf32> to vector<6x1024xf32>
    %6 = arith.subf %3, %5 : vector<6x1024xf32>
    %7 = vector.extract_strided_slice %6 {offsets = [0, 0], sizes = [1, 1024], strides = [1, 1]} : vector<6x1024xf32> to vector<1x1024xf32>
    %8 = vector.extract_strided_slice %6 {offsets = [0, 0], sizes = [1, 1024], strides = [1, 1]} : vector<6x1024xf32> to vector<1x1024xf32>
    %9 = arith.mulf %7, %8 : vector<1x1024xf32>
    %10 = vector.extract_strided_slice %6 {offsets = [1, 0], sizes = [1, 1024], strides = [1, 1]} : vector<6x1024xf32> to vector<1x1024xf32>
    %11 = vector.extract_strided_slice %6 {offsets = [1, 0], sizes = [1, 1024], strides = [1, 1]} : vector<6x1024xf32> to vector<1x1024xf32>
    %12 = arith.mulf %10, %11 : vector<1x1024xf32>
    %13 = arith.addf %9, %12 : vector<1x1024xf32>
    %14 = vector.extract_strided_slice %6 {offsets = [2, 0], sizes = [1, 1024], strides = [1, 1]} : vector<6x1024xf32> to vector<1x1024xf32>
    %15 = vector.extract_strided_slice %6 {offsets = [2, 0], sizes = [1, 1024], strides = [1, 1]} : vector<6x1024xf32> to vector<1x1024xf32>
    %16 = arith.mulf %14, %15 : vector<1x1024xf32>
    %17 = arith.addf %13, %16 : vector<1x1024xf32>
    %18 = math.sqrt %17 : vector<1x1024xf32>
    %19 = vector.extract_strided_slice %6 {offsets = [3, 0], sizes = [1, 1024], strides = [1, 1]} : vector<6x1024xf32> to vector<1x1024xf32>
    %20 = vector.extract_strided_slice %6 {offsets = [3, 0], sizes = [1, 1024], strides = [1, 1]} : vector<6x1024xf32> to vector<1x1024xf32>
    %21 = arith.mulf %19, %20 : vector<1x1024xf32>
    %22 = vector.extract_strided_slice %6 {offsets = [4, 0], sizes = [1, 1024], strides = [1, 1]} : vector<6x1024xf32> to vector<1x1024xf32>
    %23 = vector.extract_strided_slice %6 {offsets = [4, 0], sizes = [1, 1024], strides = [1, 1]} : vector<6x1024xf32> to vector<1x1024xf32>
    %24 = arith.mulf %22, %23 : vector<1x1024xf32>
    %25 = arith.addf %21, %24 : vector<1x1024xf32>
    %26 = vector.extract_strided_slice %6 {offsets = [5, 0], sizes = [1, 1024], strides = [1, 1]} : vector<6x1024xf32> to vector<1x1024xf32>
    %27 = vector.extract_strided_slice %6 {offsets = [5, 0], sizes = [1, 1024], strides = [1, 1]} : vector<6x1024xf32> to vector<1x1024xf32>
    %28 = arith.mulf %26, %27 : vector<1x1024xf32>
    %29 = arith.addf %25, %28 : vector<1x1024xf32>
    %30 = math.sqrt %29 : vector<1x1024xf32>
    %c0_7 = arith.constant 0 : index
    %c0_8 = arith.constant 0 : index
    %31 = vector.load %arg6[%c0_7, %c0_8] : memref<16x6xf32, #tpu.memory_space<vmem>>, vector<16x6xf32>
    %cst_9 = arith.constant dense<0.000000e+00> : vector<16x1024xf32>
    %32 = tpu.matmul %31, %3, %cst_9 {dimension_numbers = #tpu.dot_dimension_numbers<[1], [0], [0], [1], [0, 0, 1, 1], [], []>} : vector<16x6xf32>, vector<6x1024xf32>, vector<16x1024xf32> -> vector<16x1024xf32>
    %c0_10 = arith.constant 0 : index
    %c0_11 = arith.constant 0 : index
    %33 = vector.load %arg7[%c0_10, %c0_11] : memref<16x6xf32, #tpu.memory_space<vmem>>, vector<16x6xf32>
    %cst_12 = arith.constant dense<0.000000e+00> : vector<16x1024xf32>
    %34 = tpu.matmul %33, %5, %cst_12 {dimension_numbers = #tpu.dot_dimension_numbers<[1], [0], [0], [1], [0, 0, 1, 1], [], []>} : vector<16x6xf32>, vector<6x1024xf32>, vector<16x1024xf32> -> vector<16x1024xf32>
    %35 = arith.addf %32, %34 : vector<16x1024xf32>
    %c0_13 = arith.constant 0 : index
    %c0_14 = arith.constant 0 : index
    %36 = vector.load %arg8[%c0_13, %c0_14] : memref<16x1xf32, #tpu.memory_space<vmem>>, vector<16x1xf32>
    %37 = vector.broadcast %36 : vector<16x1xf32> to vector<16x1024xf32>
    %38 = vector.broadcast %18 : vector<1x1024xf32> to vector<16x1024xf32>
    %39 = arith.mulf %37, %38 : vector<16x1024xf32>
    %40 = arith.addf %35, %39 : vector<16x1024xf32>
    %c0_15 = arith.constant 0 : index
    %c0_16 = arith.constant 0 : index
    %41 = vector.load %arg9[%c0_15, %c0_16] : memref<16x1xf32, #tpu.memory_space<vmem>>, vector<16x1xf32>
    %42 = vector.broadcast %41 : vector<16x1xf32> to vector<16x1024xf32>
    %43 = vector.broadcast %30 : vector<1x1024xf32> to vector<16x1024xf32>
    %44 = arith.mulf %42, %43 : vector<16x1024xf32>
    %45 = arith.addf %40, %44 : vector<16x1024xf32>
    %c0_17 = arith.constant 0 : index
    %c0_18 = arith.constant 0 : index
    %46 = vector.load %arg10[%c0_17, %c0_18] : memref<16x1xf32, #tpu.memory_space<vmem>>, vector<16x1xf32>
    %47 = vector.broadcast %46 : vector<16x1xf32> to vector<16x1024xf32>
    %48 = arith.addf %45, %47 : vector<16x1024xf32>
    %cst_19 = arith.constant 0.000000e+00 : f32
    %49 = vector.broadcast %cst_19 : f32 to vector<16x1024xf32>
    %50 = arith.maximumf %48, %49 : vector<16x1024xf32>
    %c0_20 = arith.constant 0 : index
    %c0_21 = arith.constant 0 : index
    %51 = vector.load %arg11[%c0_20, %c0_21] : memref<16x16xf32, #tpu.memory_space<vmem>>, vector<16x16xf32>
    %cst_22 = arith.constant dense<0.000000e+00> : vector<16x1024xf32>
    %52 = tpu.matmul %51, %50, %cst_22 {dimension_numbers = #tpu.dot_dimension_numbers<[1], [0], [0], [1], [0, 0, 1, 1], [], []>} : vector<16x16xf32>, vector<16x1024xf32>, vector<16x1024xf32> -> vector<16x1024xf32>
    %c0_23 = arith.constant 0 : index
    %c0_24 = arith.constant 0 : index
    %53 = vector.load %arg12[%c0_23, %c0_24] : memref<16x1xf32, #tpu.memory_space<vmem>>, vector<16x1xf32>
    %54 = vector.broadcast %53 : vector<16x1xf32> to vector<16x1024xf32>
    %55 = arith.addf %52, %54 : vector<16x1024xf32>
    %cst_25 = arith.constant 0.000000e+00 : f32
    %56 = vector.broadcast %cst_25 : f32 to vector<16x1024xf32>
    %57 = arith.maximumf %55, %56 : vector<16x1024xf32>
    %c0_26 = arith.constant 0 : index
    %c0_27 = arith.constant 0 : index
    %c0_28 = arith.constant 0 : index
    %58 = vector.load %arg4[%c0_26, %c0_27, %c0_28] : memref<1x16x128xf32, #tpu.memory_space<vmem>>, vector<1x16x128xf32>
    %59 = vector.shape_cast %58 : vector<1x16x128xf32> to vector<16x128xf32>
    %cst_29 = arith.constant dense<0.000000e+00> : vector<16x1024xf32>
    %60 = tpu.matmul %59, %0, %cst_29 {dimension_numbers = #tpu.dot_dimension_numbers<[1], [0], [0], [1], [0, 0, 1, 1], [], []>} : vector<16x128xf32>, vector<128x1024xf32>, vector<16x1024xf32> -> vector<16x1024xf32>
    %c0_30 = arith.constant 0 : index
    %c0_31 = arith.constant 0 : index
    %c0_32 = arith.constant 0 : index
    %61 = vector.load %arg13[%c0_30, %c0_31, %c0_32] : memref<1x32x1024xf32, #tpu.memory_space<vmem>>, vector<1x16x1024xf32>
    %62 = vector.shape_cast %61 : vector<1x16x1024xf32> to vector<16x1024xf32>
    %63 = vector.shape_cast %57 : vector<16x1024xf32> to vector<1x16x1024xf32>
    tpu.vector_store %arg13[%c0_30, %c0_31, %c0_32], %63 {strides = array<i32>} : memref<1x32x1024xf32, #tpu.memory_space<vmem>>, vector<1x16x1024xf32>,
    %c0_33 = arith.constant 0 : index
    %c16 = arith.constant 16 : index
    %c0_34 = arith.constant 0 : index
    %64 = vector.load %arg13[%c0_33, %c16, %c0_34] : memref<1x32x1024xf32, #tpu.memory_space<vmem>>, vector<1x16x1024xf32>
    %65 = vector.shape_cast %64 : vector<1x16x1024xf32> to vector<16x1024xf32>
    %66 = vector.shape_cast %60 : vector<16x1024xf32> to vector<1x16x1024xf32>
    tpu.vector_store %arg13[%c0_33, %c16, %c0_34], %66 {strides = array<i32>} : memref<1x32x1024xf32, #tpu.memory_space<vmem>>, vector<1x16x1024xf32>,
    return
  }
  func.func @transform_0(%arg0: i32, %arg1: i32) -> (i32, i32, i32) {
    %c0_i32 = arith.constant 0 : i32
    %c0_i32_0 = arith.constant 0 : i32
    return %arg0, %c0_i32, %arg1 : i32, i32, i32
  }
  func.func @transform_1(%arg0: i32, %arg1: i32) -> (i32, i32, i32) {
    %c0_i32 = arith.constant 0 : i32
    %c0_i32_0 = arith.constant 0 : i32
    return %arg0, %c0_i32, %arg1 : i32, i32, i32
  }
  func.func @transform_2(%arg0: i32, %arg1: i32) -> (i32, i32, i32) {
    %c0_i32 = arith.constant 0 : i32
    %c0_i32_0 = arith.constant 0 : i32
    return %arg0, %c0_i32, %arg1 : i32, i32, i32
  }
  func.func @transform_3(%arg0: i32, %arg1: i32) -> (i32, i32) {
    %c0_i32 = arith.constant 0 : i32
    %c0_i32_0 = arith.constant 0 : i32
    %c0_i32_1 = arith.constant 0 : i32
    return %c0_i32, %c0_i32_0 : i32, i32
  }
  func.func @transform_4(%arg0: i32, %arg1: i32) -> (i32, i32) {
    %c0_i32 = arith.constant 0 : i32
    %c0_i32_0 = arith.constant 0 : i32
    %c0_i32_1 = arith.constant 0 : i32
    return %c0_i32, %c0_i32_0 : i32, i32
  }
  func.func @transform_5(%arg0: i32, %arg1: i32) -> (i32, i32) {
    %c0_i32 = arith.constant 0 : i32
    %c0_i32_0 = arith.constant 0 : i32
    %c0_i32_1 = arith.constant 0 : i32
    return %c0_i32, %c0_i32_0 : i32, i32
  }
  func.func @transform_6(%arg0: i32, %arg1: i32) -> (i32, i32) {
    %c0_i32 = arith.constant 0 : i32
    %c0_i32_0 = arith.constant 0 : i32
    %c0_i32_1 = arith.constant 0 : i32
    return %c0_i32, %c0_i32_0 : i32, i32
  }
  func.func @transform_7(%arg0: i32, %arg1: i32) -> (i32, i32) {
    %c0_i32 = arith.constant 0 : i32
    %c0_i32_0 = arith.constant 0 : i32
    %c0_i32_1 = arith.constant 0 : i32
    return %c0_i32, %c0_i32_0 : i32, i32
  }
  func.func @transform_8(%arg0: i32, %arg1: i32) -> (i32, i32) {
    %c0_i32 = arith.constant 0 : i32
    %c0_i32_0 = arith.constant 0 : i32
    %c0_i32_1 = arith.constant 0 : i32
    return %c0_i32, %c0_i32_0 : i32, i32
  }
  func.func @transform_9(%arg0: i32, %arg1: i32) -> (i32, i32) {
    %c0_i32 = arith.constant 0 : i32
    %c0_i32_0 = arith.constant 0 : i32
    %c0_i32_1 = arith.constant 0 : i32
    return %c0_i32, %c0_i32_0 : i32, i32
  }
  func.func @transform_10(%arg0: i32, %arg1: i32) -> (i32, i32) {
    %c0_i32 = arith.constant 0 : i32
    %c0_i32_0 = arith.constant 0 : i32
    %c0_i32_1 = arith.constant 0 : i32
    return %c0_i32, %c0_i32_0 : i32, i32
  }
  func.func @transform_11(%arg0: i32, %arg1: i32) -> (i32, i32, i32) {
    %c0_i32 = arith.constant 0 : i32
    %c0_i32_0 = arith.constant 0 : i32
    return %arg0, %c0_i32, %arg1 : i32, i32, i32
  }
}

</mosaic_0001>

<llo_original>
// kernel: local_spatial_encoding.1
$region0: #{local_spatial_encoding.1}
  #allocation0 [shape = 'u32[]', space=smem, size = 0x4, offset = 0x4, fixed_abs, tag = 'smem constant byte address 0x4 - core index']
  #allocation1 [shape = 'u32[144,128]{1,0:T(1,128)}', space=vmem, size = 0x12000, scoped, tag = 'internal scratch']
  %s0 = inlined_call_operand.vmem [shape: f32[2,6,256], index: 0, kind: input, shape index: {}]
  %s1 = inlined_call_operand.vmem [shape: f32[2,6,2048], index: 1, kind: input, shape index: {}]
  %s2 = inlined_call_operand.vmem [shape: f32[2,16,256], index: 2, kind: input, shape index: {}]
  %s3 = inlined_call_operand.vmem [shape: f32[128,1024], index: 3, kind: input, shape index: {}]
  %s4 = inlined_call_operand.vmem [shape: f32[16,6], index: 4, kind: input, shape index: {}]
  %s5 = inlined_call_operand.vmem [shape: f32[16,6], index: 5, kind: input, shape index: {}]
  %s6 = inlined_call_operand.vmem [shape: f32[16,1], index: 6, kind: input, shape index: {}]
  %s7 = inlined_call_operand.vmem [shape: f32[16,1], index: 7, kind: input, shape index: {}]
  %s8 = inlined_call_operand.vmem [shape: f32[16,1], index: 8, kind: input, shape index: {}]
  %s9 = inlined_call_operand.vmem [shape: f32[16,16], index: 9, kind: input, shape index: {}]
  %s10 = inlined_call_operand.vmem [shape: f32[16,1], index: 10, kind: input, shape index: {}]
  %s11 = inlined_call_operand.vmem [shape: f32[2,32,2048], index: 11, kind: output, shape index: {}]
  %s12 = sld [smem:[#allocation0]]
  $region134: #{local_spatial_encoding.1} parent=0
    _
  %s14 = ssub.s32 1, %s12
  %s15 = scalar_select 0, %s14, %s12
  $region1: #{local_spatial_encoding.1} parent=0
    #allocation2 [shape = 'u8[16384]{0}', space=vmem, size = 0x4000, scoped, tag = 'input window, operand 2']
    #allocation3 [shape = 'u8[262144]{0}', space=vmem, size = 0x40000, scoped, tag = 'output window, operand 0']
    loop: start=0, step=1, limit=6
    $region2: #{local_spatial_encoding.1} parent=1 // loop_pre_header
      _
    $region3: #{local_spatial_encoding.1} parent=1 // loop_header
      %s17 = sphi 0, %s21
      %p18 = scmp.ge.s32.totalorder %s17, 6
      %s24 = sphi 0, %s36
      %s25 = sphi 0, %s32
      %s26 = sphi 0, %s24
      %s27 = sphi 0, %s25
      %s28 = sphi 0, %s26
      %s29 = sphi 0, %s27
      %s41 = sphi 0, %s43
      %s44 = sphi 0, %s41
      %s45 = sphi 0, %s44
      %s61 = sphi 0, %s45
      %s69 = sphi 0, %s71
      %s72 = sphi 0, %s69
      %s73 = sphi 0, %s72
      %s89 = sphi 0, %s73
      %s97 = sphi 0, %s99
      %s100 = sphi 0, %s97
      %s101 = sphi 0, %s100
      %s117 = sphi 0, %s101
      %s121 = sphi 0, %s121
      %s123 = sphi 0, %s121
      %s124 = sphi 0, %s123
      %s138 = sphi 0, %s124
      %s142 = sphi 0, %s142
      %s144 = sphi 0, %s142
      %s145 = sphi 0, %s144
      %s159 = sphi 0, %s145
      %s163 = sphi 0, %s163
      %s165 = sphi 0, %s163
      %s166 = sphi 0, %s165
      %s180 = sphi 0, %s166
      %s184 = sphi 0, %s184
      %s186 = sphi 0, %s184
      %s187 = sphi 0, %s186
      %s201 = sphi 0, %s187
      %s205 = sphi 0, %s205
      %s207 = sphi 0, %s205
      %s208 = sphi 0, %s207
      %s222 = sphi 0, %s208
      %s226 = sphi 0, %s226
      %s228 = sphi 0, %s226
      %s229 = sphi 0, %s228
      %s243 = sphi 0, %s229
      %s247 = sphi 0, %s247
      %s249 = sphi 0, %s247
      %s250 = sphi 0, %s249
      %s264 = sphi 0, %s250
      %s268 = sphi 0, %s268
      %s270 = sphi 0, %s268
      %s271 = sphi 0, %s270
      %s285 = sphi 0, %s271
      %s293 = sphi 0, %s295
      %s296 = sphi 0, %s293
      %s297 = sphi 0, %s296
      %s313 = sphi 0, %s297
    $region4: #{local_spatial_encoding.1} parent=1 // loop_header_branch
      %20 = sbr.rel (%p18) target = $region8
    $region5: #{local_spatial_encoding.1} parent=1 // loop_body
      %s22 = ssub.s32 %s17, 1
      %s23 = ssub.s32 %s17, 2
      %s30 = sadd.s32 1, %s25
      %p31 = scmp.ge.s32.totalorder %s30, 2
      %s32 = scalar_select %p31, 0, %s30
      %s33 = sadd.s32 1, %s24
      %s34 = scalar_select %p31, %s33, %s24
      %p35 = scmp.ge.s32.totalorder %s34, 2
      %s36 = scalar_select %p35, 0, %s34
      %s37 = ssub.s32 %s24, %s36
      %s38 = ssub.s32 %s25, %s32
      %s39 = sor.u32 %s37, %s38
      %p40 = scmp.eq.s32.totalorder %s39, 0
      %s42 = sadd.s32 %s41, 1
      %s43 = scalar_select %p40, %s41, %s42
      %p46 = pneg %p40
      %p47 = scmp.eq.s32.totalorder %s17, 3
      %p48 = por %p46, %p47
      %p49 = scmp.ne.s32.totalorder %s41, %s44
      %p50 = scmp.eq.s32.totalorder %s17, 0
      %p51 = por %p49, %p50
      %p52 = scmp.ne.s32.totalorder %s41, %s44
      %p53 = scmp.eq.s32.totalorder %s22, 3
      %p54 = por %p52, %p53
      %p55 = scmp.ne.s32.totalorder %s44, %s45
      %p56 = scmp.eq.s32.totalorder %s22, 0
      %p57 = por %p55, %p56
      %p58 = scmp.ne.s32.totalorder %s44, %s45
      %p59 = scmp.eq.s32.totalorder %s23, 3
      %p60 = por %p58, %p59
      %p62 = scmp.ne.s32.totalorder %s45, %s61
      %p63 = scmp.eq.s32.totalorder %s23, 0
      %p64 = por %p62, %p63
      %s65 = ssub.s32 %s24, %s36
      %s66 = ssub.s32 %s25, %s32
      %s67 = sor.u32 %s65, %s66
      %p68 = scmp.eq.s32.totalorder %s67, 0
      %s70 = sadd.s32 %s69, 1
      %s71 = scalar_select %p68, %s69, %s70
      %p74 = pneg %p68
      %p75 = scmp.eq.s32.totalorder %s17, 3
      %p76 = por %p74, %p75
      %p77 = scmp.ne.s32.totalorder %s69, %s72
      %p78 = scmp.eq.s32.totalorder %s17, 0
      %p79 = por %p77, %p78
      %p80 = scmp.ne.s32.totalorder %s69, %s72
      %p81 = scmp.eq.s32.totalorder %s22, 3
      %p82 = por %p80, %p81
      %p83 = scmp.ne.s32.totalorder %s72, %s73
      %p84 = scmp.eq.s32.totalorder %s22, 0
      %p85 = por %p83, %p84
      %p86 = scmp.ne.s32.totalorder %s72, %s73
      %p87 = scmp.eq.s32.totalorder %s23, 3
      %p88 = por %p86, %p87
      %p90 = scmp.ne.s32.totalorder %s73, %s89
      %p91 = scmp.eq.s32.totalorder %s23, 0
      %p92 = por %p90, %p91
      %s93 = ssub.s32 %s24, %s36
      %s94 = ssub.s32 %s25, %s32
      %s95 = sor.u32 %s93, %s94
      %p96 = scmp.eq.s32.totalorder %s95, 0
      %s98 = sadd.s32 %s97, 1
      %s99 = scalar_select %p96, %s97, %s98
      %p102 = pneg %p96
      %p103 = scmp.eq.s32.totalorder %s17, 3
      %p104 = por %p102, %p103
      %p105 = scmp.ne.s32.totalorder %s97, %s100
      %p106 = scmp.eq.s32.totalorder %s17, 0
      %p107 = por %p105, %p106
      %p108 = scmp.ne.s32.totalorder %s97, %s100
      %p109 = scmp.eq.s32.totalorder %s22, 3
      %p110 = por %p108, %p109
      %p111 = scmp.ne.s32.totalorder %s100, %s101
      %p112 = scmp.eq.s32.totalorder %s22, 0
      %p113 = por %p111, %p112
      %p114 = scmp.ne.s32.totalorder %s100, %s101
      %p115 = scmp.eq.s32.totalorder %s23, 3
      %p116 = por %p114, %p115
      %p118 = scmp.ne.s32.totalorder %s101, %s117
      %p119 = scmp.eq.s32.totalorder %s23, 0
      %p120 = por %p118, %p119
      %s122 = sadd.s32 %s121, 1
      %p125 = scmp.eq.s32.totalorder %s17, 3
      %p126 = scmp.ne.s32.totalorder %s121, %s123
      %p127 = scmp.eq.s32.totalorder %s17, 0
      %p128 = por %p126, %p127
      %p129 = scmp.ne.s32.totalorder %s121, %s123
      %p130 = scmp.eq.s32.totalorder %s22, 3
      %p131 = por %p129, %p130
      %p132 = scmp.ne.s32.totalorder %s123, %s124
      %p133 = scmp.eq.s32.totalorder %s22, 0
      %p134 = por %p132, %p133
      %p135 = scmp.ne.s32.totalorder %s123, %s124
      %p136 = scmp.eq.s32.totalorder %s23, 3
      %p137 = por %p135, %p136
      %p139 = scmp.ne.s32.totalorder %s124, %s138
      %p140 = scmp.eq.s32.totalorder %s23, 0
      %p141 = por %p139, %p140
      %s143 = sadd.s32 %s142, 1
      %p146 = scmp.eq.s32.totalorder %s17, 3
      %p147 = scmp.ne.s32.totalorder %s142, %s144
      %p148 = scmp.eq.s32.totalorder %s17, 0
      %p149 = por %p147, %p148
      %p150 = scmp.ne.s32.totalorder %s142, %s144
      %p151 = scmp.eq.s32.totalorder %s22, 3
      %p152 = por %p150, %p151
      %p153 = scmp.ne.s32.totalorder %s144, %s145
      %p154 = scmp.eq.s32.totalorder %s22, 0
      %p155 = por %p153, %p154
      %p156 = scmp.ne.s32.totalorder %s144, %s145
      %p157 = scmp.eq.s32.totalorder %s23, 3
      %p158 = por %p156, %p157
      %p160 = scmp.ne.s32.totalorder %s145, %s159
      %p161 = scmp.eq.s32.totalorder %s23, 0
      %p162 = por %p160, %p161
      %s164 = sadd.s32 %s163, 1
      %p167 = scmp.eq.s32.totalorder %s17, 3
      %p168 = scmp.ne.s32.totalorder %s163, %s165
      %p169 = scmp.eq.s32.totalorder %s17, 0
      %p170 = por %p168, %p169
      %p171 = scmp.ne.s32.totalorder %s163, %s165
      %p172 = scmp.eq.s32.totalorder %s22, 3
      %p173 = por %p171, %p172
      %p174 = scmp.ne.s32.totalorder %s165, %s166
      %p175 = scmp.eq.s32.totalorder %s22, 0
      %p176 = por %p174, %p175
      %p177 = scmp.ne.s32.totalorder %s165, %s166
      %p178 = scmp.eq.s32.totalorder %s23, 3
      %p179 = por %p177, %p178
      %p181 = scmp.ne.s32.totalorder %s166, %s180
      %p182 = scmp.eq.s32.totalorder %s23, 0
      %p183 = por %p181, %p182
      %s185 = sadd.s32 %s184, 1
      %p188 = scmp.eq.s32.totalorder %s17, 3
      %p189 = scmp.ne.s32.totalorder %s184, %s186
      %p190 = scmp.eq.s32.totalorder %s17, 0
      %p191 = por %p189, %p190
      %p192 = scmp.ne.s32.totalorder %s184, %s186
      %p193 = scmp.eq.s32.totalorder %s22, 3
      %p194 = por %p192, %p193
      %p195 = scmp.ne.s32.totalorder %s186, %s187
      %p196 = scmp.eq.s32.totalorder %s22, 0
      %p197 = por %p195, %p196
      %p198 = scmp.ne.s32.totalorder %s186, %s187
      %p199 = scmp.eq.s32.totalorder %s23, 3
      %p200 = por %p198, %p199
      %p202 = scmp.ne.s32.totalorder %s187, %s201
      %p203 = scmp.eq.s32.totalorder %s23, 0
      %p204 = por %p202, %p203
      %s206 = sadd.s32 %s205, 1
      %p209 = scmp.eq.s32.totalorder %s17, 3
      %p210 = scmp.ne.s32.totalorder %s205, %s207
      %p211 = scmp.eq.s32.totalorder %s17, 0
      %p212 = por %p210, %p211
      %p213 = scmp.ne.s32.totalorder %s205, %s207
      %p214 = scmp.eq.s32.totalorder %s22, 3
      %p215 = por %p213, %p214
      %p216 = scmp.ne.s32.totalorder %s207, %s208
      %p217 = scmp.eq.s32.totalorder %s22, 0
      %p218 = por %p216, %p217
      %p219 = scmp.ne.s32.totalorder %s207, %s208
      %p220 = scmp.eq.s32.totalorder %s23, 3
      %p221 = por %p219, %p220
      %p223 = scmp.ne.s32.totalorder %s208, %s222
      %p224 = scmp.eq.s32.totalorder %s23, 0
      %p225 = por %p223, %p224
      %s227 = sadd.s32 %s226, 1
      %p230 = scmp.eq.s32.totalorder %s17, 3
      %p231 = scmp.ne.s32.totalorder %s226, %s228
      %p232 = scmp.eq.s32.totalorder %s17, 0
      %p233 = por %p231, %p232
      %p234 = scmp.ne.s32.totalorder %s226, %s228
      %p235 = scmp.eq.s32.totalorder %s22, 3
      %p236 = por %p234, %p235
      %p237 = scmp.ne.s32.totalorder %s228, %s229
      %p238 = scmp.eq.s32.totalorder %s22, 0
      %p239 = por %p237, %p238
      %p240 = scmp.ne.s32.totalorder %s228, %s229
      %p241 = scmp.eq.s32.totalorder %s23, 3
      %p242 = por %p240, %p241
      %p244 = scmp.ne.s32.totalorder %s229, %s243
      %p245 = scmp.eq.s32.totalorder %s23, 0
      %p246 = por %p244, %p245
      %s248 = sadd.s32 %s247, 1
      %p251 = scmp.eq.s32.totalorder %s17, 3
      %p252 = scmp.ne.s32.totalorder %s247, %s249
      %p253 = scmp.eq.s32.totalorder %s17, 0
      %p254 = por %p252, %p253
      %p255 = scmp.ne.s32.totalorder %s247, %s249
      %p256 = scmp.eq.s32.totalorder %s22, 3
      %p257 = por %p255, %p256
      %p258 = scmp.ne.s32.totalorder %s249, %s250
      %p259 = scmp.eq.s32.totalorder %s22, 0
      %p260 = por %p258, %p259
      %p261 = scmp.ne.s32.totalorder %s249, %s250
      %p262 = scmp.eq.s32.totalorder %s23, 3
      %p263 = por %p261, %p262
      %p265 = scmp.ne.s32.totalorder %s250, %s264
      %p266 = scmp.eq.s32.totalorder %s23, 0
      %p267 = por %p265, %p266
      %s269 = sadd.s32 %s268, 1
      %p272 = scmp.eq.s32.totalorder %s17, 3
      %p273 = scmp.ne.s32.totalorder %s268, %s270
      %p274 = scmp.eq.s32.totalorder %s17, 0
      %p275 = por %p273, %p274
      %p276 = scmp.ne.s32.totalorder %s268, %s270
      %p277 = scmp.eq.s32.totalorder %s22, 3
      %p278 = por %p276, %p277
      %p279 = scmp.ne.s32.totalorder %s270, %s271
      %p280 = scmp.eq.s32.totalorder %s22, 0
      %p281 = por %p279, %p280
      %p282 = scmp.ne.s32.totalorder %s270, %s271
      %p283 = scmp.eq.s32.totalorder %s23, 3
      %p284 = por %p282, %p283
      %p286 = scmp.ne.s32.totalorder %s271, %s285
      %p287 = scmp.eq.s32.totalorder %s23, 0
      %p288 = por %p286, %p287
      %s289 = ssub.s32 %s24, %s36
      %s290 = ssub.s32 %s25, %s32
      %s291 = sor.u32 %s289, %s290
      %p292 = scmp.eq.s32.totalorder %s291, 0
      %s294 = sadd.s32 %s293, 1
      %s295 = scalar_select %p292, %s293, %s294
      %p298 = pneg %p292
      %p299 = scmp.eq.s32.totalorder %s17, 3
      %p300 = por %p298, %p299
      %p301 = scmp.ne.s32.totalorder %s293, %s296
      %p302 = scmp.eq.s32.totalorder %s17, 0
      %p303 = por %p301, %p302
      %p304 = scmp.ne.s32.totalorder %s293, %s296
      %p305 = scmp.eq.s32.totalorder %s22, 3
      %p306 = por %p304, %p305
      %p307 = scmp.ne.s32.totalorder %s296, %s297
      %p308 = scmp.eq.s32.totalorder %s22, 0
      %p309 = por %p307, %p308
      %p310 = scmp.ne.s32.totalorder %s296, %s297
      %p311 = scmp.eq.s32.totalorder %s23, 3
      %p312 = por %p310, %p311
      %p314 = scmp.ne.s32.totalorder %s297, %s313
      %p315 = scmp.eq.s32.totalorder %s23, 0
      %p316 = por %p314, %p315
      %p317 = scmp.le.s32.totalorder 1, %s17
      %p318 = scmp.lt.s32.totalorder %s17, 5
      %p319 = pnand %p317, %p318
      %p320 = pneg %p319
      // Predicated region
      $region9: #{local_spatial_encoding.1} parent=5 // pred_check
        _
      $region10: #{local_spatial_encoding.1} parent=5 // pred_check_branch
        %322 = sbr.rel (%p319) target = $region12
      $region11: #{local_spatial_encoding.1} parent=5 // pred_region
        %s323 = ssub.s32 %s17, 1
        // Predicated region
        $region13: #{local_spatial_encoding.1} parent=11 // pred_check
          %p324 = pneg %p134
        $region14: #{local_spatial_encoding.1} parent=11 // pred_check_branch
          %326 = sbr.rel (%p324) target = $region16
        $region15: #{local_spatial_encoding.1} parent=11 // pred_region
          _
        $region16: #{local_spatial_encoding.1} parent=11 // pred_fallthru
          _
        // Predicated region
        $region17: #{local_spatial_encoding.1} parent=11 // pred_check
          %p327 = pneg %p155
        $region18: #{local_spatial_encoding.1} parent=11 // pred_check_branch
          %329 = sbr.rel (%p327) target = $region20
        $region19: #{local_spatial_encoding.1} parent=11 // pred_region
          _
        $region20: #{local_spatial_encoding.1} parent=11 // pred_fallthru
          _
        // Predicated region
        $region21: #{local_spatial_encoding.1} parent=11 // pred_check
          %p330 = pneg %p176
        $region22: #{local_spatial_encoding.1} parent=11 // pred_check_branch
          %332 = sbr.rel (%p330) target = $region24
        $region23: #{local_spatial_encoding.1} parent=11 // pred_region
          _
        $region24: #{local_spatial_encoding.1} parent=11 // pred_fallthru
          _
        // Predicated region
        $region25: #{local_spatial_encoding.1} parent=11 // pred_check
          %p333 = pneg %p197
        $region26: #{local_spatial_encoding.1} parent=11 // pred_check_branch
          %335 = sbr.rel (%p333) target = $region28
        $region27: #{local_spatial_encoding.1} parent=11 // pred_region
          _
        $region28: #{local_spatial_encoding.1} parent=11 // pred_fallthru
          _
        // Predicated region
        $region29: #{local_spatial_encoding.1} parent=11 // pred_check
          %p336 = pneg %p218
        $region30: #{local_spatial_encoding.1} parent=11 // pred_check_branch
          %338 = sbr.rel (%p336) target = $region32
        $region31: #{local_spatial_encoding.1} parent=11 // pred_region
          _
        $region32: #{local_spatial_encoding.1} parent=11 // pred_fallthru
          _
        // Predicated region
        $region33: #{local_spatial_encoding.1} parent=11 // pred_check
          %p339 = pneg %p239
        $region34: #{local_spatial_encoding.1} parent=11 // pred_check_branch
          %341 = sbr.rel (%p339) target = $region36
        $region35: #{local_spatial_encoding.1} parent=11 // pred_region
          _
        $region36: #{local_spatial_encoding.1} parent=11 // pred_fallthru
          _
        // Predicated region
        $region37: #{local_spatial_encoding.1} parent=11 // pred_check
          %p342 = pneg %p260
        $region38: #{local_spatial_encoding.1} parent=11 // pred_check_branch
          %344 = sbr.rel (%p342) target = $region40
        $region39: #{local_spatial_encoding.1} parent=11 // pred_region
          _
        $region40: #{local_spatial_encoding.1} parent=11 // pred_fallthru
          _
        // Predicated region
        $region41: #{local_spatial_encoding.1} parent=11 // pred_check
          %p345 = pneg %p281
        $region42: #{local_spatial_encoding.1} parent=11 // pred_check_branch
          %347 = sbr.rel (%p345) target = $region44
        $region43: #{local_spatial_encoding.1} parent=11 // pred_region
          _
        $region44: #{local_spatial_encoding.1} parent=11 // pred_fallthru
          _
      $region12: #{local_spatial_encoding.1} parent=5 // pred_fallthru
        _
      %p348 = scmp.lt.s32.totalorder %s17, 4
      // Predicated region
      $region45: #{local_spatial_encoding.1} parent=5 // pred_check
        %p349 = pneg %p348
      $region46: #{local_spatial_encoding.1} parent=5 // pred_check_branch
        %351 = sbr.rel (%p349) target = $region48
      $region47: #{local_spatial_encoding.1} parent=5 // pred_region
        // Predicated region
        $region49: #{local_spatial_encoding.1} parent=47 // pred_check
          %p352 = pneg %p51
        $region50: #{local_spatial_encoding.1} parent=47 // pred_check_branch
          %354 = sbr.rel (%p352) target = $region52
        $region51: #{local_spatial_encoding.1} parent=47 // pred_region
          %p355 = scmp.lt.s32.totalorder %s24, 1
          %s356 = scalar_select %p355, %s24, 1
          %p357 = scmp.lt.s32.totalorder %s25, 1
          %s358 = scalar_select %p357, %s25, 1
          %s359 = smul.addr %s356, 2
          %s360 = sadd.s32 %s358, %s359
          %s361 = smul.addr %s360, 8
          %s362 = scalar_lea.vmem %s0, %s361
        $region52: #{local_spatial_encoding.1} parent=47 // pred_fallthru
          _
        // Predicated region
        $region53: #{local_spatial_encoding.1} parent=47 // pred_check
          %p363 = pneg %p79
        $region54: #{local_spatial_encoding.1} parent=47 // pred_check_branch
          %365 = sbr.rel (%p363) target = $region56
        $region55: #{local_spatial_encoding.1} parent=47 // pred_region
          %s366 = smul.u32 8, %s25
          %p367 = scmp.lt.s32.totalorder %s24, 1
          %s368 = scalar_select %p367, %s24, 1
          %p369 = scmp.lt.s32.totalorder %s366, 15
          %s370 = scalar_select %p369, %s366, 15
          %s371 = smul.addr %s368, 16
          %s372 = sadd.s32 %s370, %s371
          %s373 = smul.addr %s372, 8
          %s374 = scalar_lea.vmem %s1, %s373
          %s375 = smul.u32 8, %s25
        $region56: #{local_spatial_encoding.1} parent=47 // pred_fallthru
          _
        // Predicated region
        $region57: #{local_spatial_encoding.1} parent=47 // pred_check
          %p376 = pneg %p107
        $region58: #{local_spatial_encoding.1} parent=47 // pred_check_branch
          %378 = sbr.rel (%p376) target = $region60
        $region59: #{local_spatial_encoding.1} parent=47 // pred_region
          %s379 = sand.u32 %s97, 1
          %s380 = sand.u32 %s97, 1
          %s381 = smul.addr %s380, 16
          %s382 = scalar_lea.vmem [#allocation2], %s381
          %s383 = smul.addr %s24, 4
          %s384 = sadd.s32 %s25, %s383
          %s385 = smul.addr %s384, 8
          %s386 = scalar_lea.vmem %s2, %s385
          // Predicated region
          $region61: #{local_spatial_encoding.1} parent=59 // pred_check
            _
          $region62: #{local_spatial_encoding.1} parent=59 // pred_check_branch
            %388 = sbr.rel (0) target = $region64
          $region63: #{local_spatial_encoding.1} parent=59 // pred_region
            // Predicated region
            $region65: #{local_spatial_encoding.1} parent=63 // pred_check
              _
            $region66: #{local_spatial_encoding.1} parent=63 // pred_check_branch
              %390 = sbr.rel (0) target = $region68
            $region67: #{local_spatial_encoding.1} parent=63 // pred_region
              // Predicated region
              $region80: #{local_spatial_encoding.1} parent=67 // pred_check
                _
              $region81: #{local_spatial_encoding.1} parent=67 // pred_check_branch
                %407 = sbr.rel (0) target = $region83
              $region82: #{local_spatial_encoding.1} parent=67 // pred_region
                loop: start=0, step=1, limit=1
                $region84: #{local_spatial_encoding.1} parent=82 // loop_pre_header
                  _
                $region85: #{local_spatial_encoding.1} parent=82 // loop_header
                  %s409 = sphi 0, %s413
                  %p410 = scmp.ge.s32.totalorder %s409, 1
                  %s414 = sphi %s386, %s386
                  %s415 = sphi %s382, %s382
                $region86: #{local_spatial_encoding.1} parent=82 // loop_header_branch
                  %412 = sbr.rel (%p410) target = $region90
                $region87: #{local_spatial_encoding.1} parent=82 // loop_body
                  %v416 = vld [vmem:[%s414] sm:$0xff]
                  %417 = vst [vmem:[%s415] sm:$0xff] %v416
                  %v418 = vld [vmem:[%s414 + $0x10] sm:$0xff]
                  %419 = vst [vmem:[%s415 + $0x8] sm:$0xff] %v418
                $region88: #{local_spatial_encoding.1} parent=82 // loop_footer
                  %s413 = sadd.s32 1, %s409
                $region89: #{local_spatial_encoding.1} parent=82 // loop_footer_branch
                  %408 = sbr.rel target = $region85
                $region90: #{local_spatial_encoding.1} parent=82 // loop_exit
                  _
              $region83: #{local_spatial_encoding.1} parent=67 // pred_fallthru
                _
              // Predicated region
              $region91: #{local_spatial_encoding.1} parent=67 // pred_check
                _
              $region92: #{local_spatial_encoding.1} parent=67 // pred_check_branch
                %421 = sbr.rel target = $region94
              $region93: #{local_spatial_encoding.1} parent=67 // pred_region
                _
              $region94: #{local_spatial_encoding.1} parent=67 // pred_fallthru
                _
            $region68: #{local_spatial_encoding.1} parent=63 // pred_fallthru
              _
            // Predicated region
            $region69: #{local_spatial_encoding.1} parent=63 // pred_check
              _
            $region70: #{local_spatial_encoding.1} parent=63 // pred_check_branch
              %392 = sbr.rel target = $region72
            $region71: #{local_spatial_encoding.1} parent=63 // pred_region
              loop: start=0, step=1, limit=1
              $region73: #{local_spatial_encoding.1} parent=71 // loop_pre_header
                _
              $region74: #{local_spatial_encoding.1} parent=71 // loop_header
                %s395 = sphi 0, %s399
                %p396 = scmp.ge.s32.totalorder %s395, 1
                %s400 = sphi %s386, %s386
                %s401 = sphi %s382, %s382
              $region75: #{local_spatial_encoding.1} parent=71 // loop_header_branch
                %398 = sbr.rel (%p396) target = $region79
              $region76: #{local_spatial_encoding.1} parent=71 // loop_body
                %v402 = vld [vmem:[%s400] sm:$0xff]
                %403 = vst [vmem:[%s401] sm:$0xff] %v402
                %v404 = vld [vmem:[%s400 + $0x10] sm:$0xff]
                %405 = vst [vmem:[%s401 + $0x8] sm:$0xff] %v404
              $region77: #{local_spatial_encoding.1} parent=71 // loop_footer
                %s399 = sadd.s32 1, %s395
              $region78: #{local_spatial_encoding.1} parent=71 // loop_footer_branch
                %394 = sbr.rel target = $region74
              $region79: #{local_spatial_encoding.1} parent=71 // loop_exit
                _
            $region72: #{local_spatial_encoding.1} parent=63 // pred_fallthru
              _
          $region64: #{local_spatial_encoding.1} parent=59 // pred_fallthru
            _
          %422 = vnop
        $region60: #{local_spatial_encoding.1} parent=47 // pred_fallthru
          _
      $region48: #{local_spatial_encoding.1} parent=5 // pred_fallthru
        _
      %p423 = scmp.le.s32.totalorder 1, %s17
      %p424 = scmp.lt.s32.totalorder %s17, 5
      %p425 = pnand %p423, %p424
      %p426 = pneg %p425
      // Predicated region
      $region95: #{local_spatial_encoding.1} parent=5 // pred_check
        _
      $region96: #{local_spatial_encoding.1} parent=5 // pred_check_branch
        %428 = sbr.rel (%p425) target = $region98
      $region97: #{local_spatial_encoding.1} parent=5 // pred_region
        %s429 = ssub.s32 %s17, 1
        %s430 = sand.u32 %s100, 1
        %s431 = sand.u32 %s100, 1
        %s432 = smul.addr %s431, 16
        %s433 = scalar_lea.vmem [#allocation2], %s432
        // Predicated region
        $region99: #{local_spatial_encoding.1} parent=97 // pred_check
          %p434 = pneg %p113
        $region100: #{local_spatial_encoding.1} parent=97 // pred_check_branch
          %436 = sbr.rel (%p434) target = $region102
        $region101: #{local_spatial_encoding.1} parent=97 // pred_region
          _
        $region102: #{local_spatial_encoding.1} parent=97 // pred_fallthru
          _
        %p437 = scmp.lt.s32.totalorder %s26, 1
        %s438 = scalar_select %p437, %s26, 1
        %p439 = scmp.lt.s32.totalorder %s27, 1
        %s440 = scalar_select %p439, %s27, 1
        %s441 = smul.addr %s438, 2
        %s442 = sadd.s32 %s440, %s441
        %s443 = smul.addr %s442, 8
        %s444 = scalar_lea.vmem %s0, %s443
        %p445 = pneg %p57
        %p446 = pneg %p54
        %s447 = smul.u32 8, %s27
        %p448 = scmp.lt.s32.totalorder %s26, 1
        %s449 = scalar_select %p448, %s26, 1
        %p450 = scmp.lt.s32.totalorder %s447, 15
        %s451 = scalar_select %p450, %s447, 15
        %s452 = smul.addr %s449, 16
        %s453 = sadd.s32 %s451, %s452
        %s454 = smul.addr %s453, 8
        %s455 = scalar_lea.vmem %s1, %s454
        %p456 = pneg %p85
        %p457 = pneg %p82
        %s458 = sand.u32 %s100, 1
        %s459 = sand.u32 %s100, 1
        %s460 = smul.addr %s459, 16
        %s461 = scalar_lea.vmem [#allocation2], %s460
        %p462 = pneg %p113
        %p463 = pneg %p110
        %p464 = pneg %p134
        %p465 = pneg %p131
        %p466 = pneg %p155
        %p467 = pneg %p152
        %p468 = pneg %p176
        %p469 = pneg %p173
        %p470 = pneg %p197
        %p471 = pneg %p194
        %p472 = pneg %p218
        %p473 = pneg %p215
        %p474 = pneg %p239
        %p475 = pneg %p236
        %p476 = pneg %p260
        %p477 = pneg %p257
        %p478 = pneg %p281
        %p479 = pneg %p278
        %p480 = pneg %p309
        %p481 = pneg %p306
        %s482 = sand.u32 %s296, 1
        %s483 = sand.u32 %s296, 1
        %s484 = smul.addr %s483, 256
        %s485 = scalar_lea.vmem [#allocation3], %s484
        %p486 = scmp.lt.s32.totalorder %s26, 1
        %s487 = scalar_select %p486, %s26, 1
        %p488 = scmp.lt.s32.totalorder %s27, 1
        %s489 = scalar_select %p488, %s27, 1
        %s490 = smul.addr %s487, 2
        %s491 = sadd.s32 %s489, %s490
        %s492 = smul.addr %s491, 8
        %s493 = scalar_lea.vmem %s0, %s492
        %s494 = smul.u32 8, %s27
        %p495 = scmp.lt.s32.totalorder %s26, 1
        %s496 = scalar_select %p495, %s26, 1
        %p497 = scmp.lt.s32.totalorder %s494, 15
        %s498 = scalar_select %p497, %s494, 15
        %s499 = smul.addr %s496, 16
        %s500 = sadd.s32 %s498, %s499
        %s501 = smul.addr %s500, 8
        %s502 = scalar_lea.vmem %s1, %s501
        %s503 = smul.u32 8, %s27
        %s504 = smul.u32 8, %s27
        %v505 = vld [vmem:[%s3] sm:$0xff]
        %v506 = vld [vmem:[%s3 + $0x8] sm:$0xff]
        %v507 = vld [vmem:[%s3 + $0x10] sm:$0xff]
        %v508 = vld [vmem:[%s3 + $0x18] sm:$0xff]
        %v509 = vld [vmem:[%s3 + $0x20] sm:$0xff]
        %v510 = vld [vmem:[%s3 + $0x28] sm:$0xff]
        %v511 = vld [vmem:[%s3 + $0x30] sm:$0xff]
        %v512 = vld [vmem:[%s3 + $0x38] sm:$0xff]
        %v513 = vld [vmem:[%s3 + $0x40] sm:$0xff]
        %v514 = vld [vmem:[%s3 + $0x48] sm:$0xff]
        %v515 = vld [vmem:[%s3 + $0x50] sm:$0xff]
        %v516 = vld [vmem:[%s3 + $0x58] sm:$0xff]
        %v517 = vld [vmem:[%s3 + $0x60] sm:$0xff]
        %v518 = vld [vmem:[%s3 + $0x68] sm:$0xff]
        %v519 = vld [vmem:[%s3 + $0x70] sm:$0xff]
        %v520 = vld [vmem:[%s3 + $0x78] sm:$0xff]
        %v521 = vld [vmem:[%s3 + $0x80] sm:$0xff]
        %v522 = vld [vmem:[%s3 + $0x88] sm:$0xff]
        %v523 = vld [vmem:[%s3 + $0x90] sm:$0xff]
        %v524 = vld [vmem:[%s3 + $0x98] sm:$0xff]
        %v525 = vld [vmem:[%s3 + $0xa0] sm:$0xff]
        %v526 = vld [vmem:[%s3 + $0xa8] sm:$0xff]
        %v527 = vld [vmem:[%s3 + $0xb0] sm:$0xff]
        %v528 = vld [vmem:[%s3 + $0xb8] sm:$0xff]
        %v529 = vld [vmem:[%s3 + $0xc0] sm:$0xff]
        %v530 = vld [vmem:[%s3 + $0xc8] sm:$0xff]
        %v531 = vld [vmem:[%s3 + $0xd0] sm:$0xff]
        %v532 = vld [vmem:[%s3 + $0xd8] sm:$0xff]
        %v533 = vld [vmem:[%s3 + $0xe0] sm:$0xff]
        %v534 = vld [vmem:[%s3 + $0xe8] sm:$0xff]
        %v535 = vld [vmem:[%s3 + $0xf0] sm:$0xff]
        %v536 = vld [vmem:[%s3 + $0xf8] sm:$0xff]
        %v537 = vld [vmem:[%s3 + $0x100] sm:$0xff]
        %v538 = vld [vmem:[%s3 + $0x108] sm:$0xff]
        %v539 = vld [vmem:[%s3 + $0x110] sm:$0xff]
        %v540 = vld [vmem:[%s3 + $0x118] sm:$0xff]
        %v541 = vld [vmem:[%s3 + $0x120] sm:$0xff]
        %v542 = vld [vmem:[%s3 + $0x128] sm:$0xff]
        %v543 = vld [vmem:[%s3 + $0x130] sm:$0xff]
        %v544 = vld [vmem:[%s3 + $0x138] sm:$0xff]
        %v545 = vld [vmem:[%s3 + $0x140] sm:$0xff]
        %v546 = vld [vmem:[%s3 + $0x148] sm:$0xff]
        %v547 = vld [vmem:[%s3 + $0x150] sm:$0xff]
        %v548 = vld [vmem:[%s3 + $0x158] sm:$0xff]
        %v549 = vld [vmem:[%s3 + $0x160] sm:$0xff]
        %v550 = vld [vmem:[%s3 + $0x168] sm:$0xff]
        %v551 = vld [vmem:[%s3 + $0x170] sm:$0xff]
        %v552 = vld [vmem:[%s3 + $0x178] sm:$0xff]
        %v553 = vld [vmem:[%s3 + $0x180] sm:$0xff]
        %v554 = vld [vmem:[%s3 + $0x188] sm:$0xff]
        %v555 = vld [vmem:[%s3 + $0x190] sm:$0xff]
        %v556 = vld [vmem:[%s3 + $0x198] sm:$0xff]
        %v557 = vld [vmem:[%s3 + $0x1a0] sm:$0xff]
        %v558 = vld [vmem:[%s3 + $0x1a8] sm:$0xff]
        %v559 = vld [vmem:[%s3 + $0x1b0] sm:$0xff]
        %v560 = vld [vmem:[%s3 + $0x1b8] sm:$0xff]
        %v561 = vld [vmem:[%s3 + $0x1c0] sm:$0xff]
        %v562 = vld [vmem:[%s3 + $0x1c8] sm:$0xff]
        %v563 = vld [vmem:[%s3 + $0x1d0] sm:$0xff]
        %v564 = vld [vmem:[%s3 + $0x1d8] sm:$0xff]
        %v565 = vld [vmem:[%s3 + $0x1e0] sm:$0xff]
        %v566 = vld [vmem:[%s3 + $0x1e8] sm:$0xff]
        %v567 = vld [vmem:[%s3 + $0x1f0] sm:$0xff]
        %v568 = vld [vmem:[%s3 + $0x1f8] sm:$0xff]
        %v569 = vld [vmem:[%s3 + $0x200] sm:$0xff]
        %v570 = vld [vmem:[%s3 + $0x208] sm:$0xff]
        %v571 = vld [vmem:[%s3 + $0x210] sm:$0xff]
        %v572 = vld [vmem:[%s3 + $0x218] sm:$0xff]
        %v573 = vld [vmem:[%s3 + $0x220] sm:$0xff]
        %v574 = vld [vmem:[%s3 + $0x228] sm:$0xff]
        %v575 = vld [vmem:[%s3 + $0x230] sm:$0xff]
        %v576 = vld [vmem:[%s3 + $0x238] sm:$0xff]
        %v577 = vld [vmem:[%s3 + $0x240] sm:$0xff]
        %v578 = vld [vmem:[%s3 + $0x248] sm:$0xff]
        %v579 = vld [vmem:[%s3 + $0x250] sm:$0xff]
        %v580 = vld [vmem:[%s3 + $0x258] sm:$0xff]
        %v581 = vld [vmem:[%s3 + $0x260] sm:$0xff]
        %v582 = vld [vmem:[%s3 + $0x268] sm:$0xff]
        %v583 = vld [vmem:[%s3 + $0x270] sm:$0xff]
        %v584 = vld [vmem:[%s3 + $0x278] sm:$0xff]
        %v585 = vld [vmem:[%s3 + $0x280] sm:$0xff]
        %v586 = vld [vmem:[%s3 + $0x288] sm:$0xff]
        %v587 = vld [vmem:[%s3 + $0x290] sm:$0xff]
        %v588 = vld [vmem:[%s3 + $0x298] sm:$0xff]
        %v589 = vld [vmem:[%s3 + $0x2a0] sm:$0xff]
        %v590 = vld [vmem:[%s3 + $0x2a8] sm:$0xff]
        %v591 = vld [vmem:[%s3 + $0x2b0] sm:$0xff]
        %v592 = vld [vmem:[%s3 + $0x2b8] sm:$0xff]
        %v593 = vld [vmem:[%s3 + $0x2c0] sm:$0xff]
        %v594 = vld [vmem:[%s3 + $0x2c8] sm:$0xff]
        %v595 = vld [vmem:[%s3 + $0x2d0] sm:$0xff]
        %v596 = vld [vmem:[%s3 + $0x2d8] sm:$0xff]
        %v597 = vld [vmem:[%s3 + $0x2e0] sm:$0xff]
        %v598 = vld [vmem:[%s3 + $0x2e8] sm:$0xff]
        %v599 = vld [vmem:[%s3 + $0x2f0] sm:$0xff]
        %v600 = vld [vmem:[%s3 + $0x2f8] sm:$0xff]
        %v601 = vld [vmem:[%s3 + $0x300] sm:$0xff]
        %v602 = vld [vmem:[%s3 + $0x308] sm:$0xff]
        %v603 = vld [vmem:[%s3 + $0x310] sm:$0xff]
        %v604 = vld [vmem:[%s3 + $0x318] sm:$0xff]
        %v605 = vld [vmem:[%s3 + $0x320] sm:$0xff]
        %v606 = vld [vmem:[%s3 + $0x328] sm:$0xff]
        %v607 = vld [vmem:[%s3 + $0x330] sm:$0xff]
        %v608 = vld [vmem:[%s3 + $0x338] sm:$0xff]
        %v609 = vld [vmem:[%s3 + $0x340] sm:$0xff]
        %v610 = vld [vmem:[%s3 + $0x348] sm:$0xff]
        %v611 = vld [vmem:[%s3 + $0x350] sm:$0xff]
        %v612 = vld [vmem:[%s3 + $0x358] sm:$0xff]
        %v613 = vld [vmem:[%s3 + $0x360] sm:$0xff]
        %v614 = vld [vmem:[%s3 + $0x368] sm:$0xff]
        %v615 = vld [vmem:[%s3 + $0x370] sm:$0xff]
        %v616 = vld [vmem:[%s3 + $0x378] sm:$0xff]
        %v617 = vld [vmem:[%s3 + $0x380] sm:$0xff]
        %v618 = vld [vmem:[%s3 + $0x388] sm:$0xff]
        %v619 = vld [vmem:[%s3 + $0x390] sm:$0xff]
        %v620 = vld [vmem:[%s3 + $0x398] sm:$0xff]
        %v621 = vld [vmem:[%s3 + $0x3a0] sm:$0xff]
        %v622 = vld [vmem:[%s3 + $0x3a8] sm:$0xff]
        %v623 = vld [vmem:[%s3 + $0x3b0] sm:$0xff]
        %v624 = vld [vmem:[%s3 + $0x3b8] sm:$0xff]
        %v625 = vld [vmem:[%s3 + $0x3c0] sm:$0xff]
        %v626 = vld [vmem:[%s3 + $0x3c8] sm:$0xff]
        %v627 = vld [vmem:[%s3 + $0x3d0] sm:$0xff]
        %v628 = vld [vmem:[%s3 + $0x3d8] sm:$0xff]
        %v629 = vld [vmem:[%s3 + $0x3e0] sm:$0xff]
        %v630 = vld [vmem:[%s3 + $0x3e8] sm:$0xff]
        %v631 = vld [vmem:[%s3 + $0x3f0] sm:$0xff]
        %v632 = vld [vmem:[%s3 + $0x3f8] sm:$0xff]
        %v633 = vld [vmem:[%s493] sm:$0x3f]
        %634 = vmatprep.subr.mxu0 %v506
        %635 = vmatpush1.msra.mxu0 %v505
        %636 = vmatprep.subr.mxu0 %v514
        %637 = vmatpush1.msra.mxu0 %v513
        %638 = vmatprep.subr.mxu0 %v522
        %639 = vmatpush1.msra.mxu0 %v521
        %640 = vmatprep.subr.mxu0 %v530
        %641 = vmatpush1.msra.mxu0 %v529
        %642 = vmatprep.subr.mxu0 %v538
        %643 = vmatpush1.msra.mxu0 %v537
        %644 = vmatprep.subr.mxu0 %v546
        %645 = vmatpush1.msra.mxu0 %v545
        %646 = vmatprep.subr.mxu0 %v554
        %647 = vmatpush1.msra.mxu0 %v553
        %648 = vmatprep.subr.mxu0 %v562
        %649 = vmatpush1.msra.mxu0 %v561
        %650 = vmatprep.subr.mxu0 %v570
        %651 = vmatpush1.msra.mxu0 %v569
        %652 = vmatprep.subr.mxu0 %v578
        %653 = vmatpush1.msra.mxu0 %v577
        %654 = vmatprep.subr.mxu0 %v586
        %655 = vmatpush1.msra.mxu0 %v585
        %656 = vmatprep.subr.mxu0 %v594
        %657 = vmatpush1.msra.mxu0 %v593
        %658 = vmatprep.subr.mxu0 %v602
        %659 = vmatpush1.msra.mxu0 %v601
        %660 = vmatprep.subr.mxu0 %v610
        %661 = vmatpush1.msra.mxu0 %v609
        %662 = vmatprep.subr.mxu0 %v618
        %663 = vmatpush1.msra.mxu0 %v617
        %664 = vmatprep.subr.mxu0 %v626
        %665 = vmatpush1.msra.mxu0 %v625
        %666 = vmatprep.subr.mxu0 0.0
        %667 = vmatpush1.msra.mxu0 0.0
        %668 = vmatprep.subr.mxu0 0.0
        %669 = vmatpush1.msra.mxu0 0.0
        %670 = vmatprep.subr.mxu0 0.0
        %671 = vmatpush1.msra.mxu0 0.0
        %672 = vmatprep.subr.mxu0 0.0
        %673 = vmatpush1.msra.mxu0 0.0
        %674 = vmatprep.subr.mxu0 0.0
        %675 = vmatpush1.msra.mxu0 0.0
        %676 = vmatprep.subr.mxu0 0.0
        %677 = vmatpush1.msra.mxu0 0.0
        %678 = vmatprep.subr.mxu0 0.0
        %679 = vmatpush1.msra.mxu0 0.0
        %680 = vmatprep.subr.mxu0 0.0
        %681 = vmatpush1.msra.mxu0 0.0
        %682 = vmatprep.subr.mxu0 0.0
        %683 = vmatpush1.msra.mxu0 0.0
        %684 = vmatprep.subr.mxu0 0.0
        %685 = vmatpush1.msra.mxu0 0.0
        %686 = vmatprep.subr.mxu0 0.0
        %687 = vmatpush1.msra.mxu0 0.0
        %688 = vmatprep.subr.mxu0 0.0
        %689 = vmatpush1.msra.mxu0 0.0
        %690 = vmatprep.subr.mxu0 0.0
        %691 = vmatpush1.msra.mxu0 0.0
        %692 = vmatprep.subr.mxu0 0.0
        %693 = vmatpush1.msra.mxu0 0.0
        %694 = vmatprep.subr.mxu0 0.0
        %695 = vmatpush1.msra.mxu0 0.0
        %696 = vmatprep.subr.mxu0 0.0
        %697 = vmatpush1.msra.mxu0 0.0
        %698 = vmatprep.mubr.f32.mxu0 0.0
        %699 = vmatmul.mubr.f32.gmra.mrb[0].mxu0 %v633
        %v700 = vpop.f32.mrb[0].mxu0
        %v701 = vadd.f32 0.0, %v700
        %v702 = vpop.f32.mrb[0].mxu0
        %v703 = vadd.f32 0.0, %v702
        %704 = vdwg.mxu0
        %705 = vmatprep.subr.mxu0 %v508
        %706 = vmatpush1.msra.mxu0 %v507
        %707 = vmatprep.subr.mxu0 %v516
        %708 = vmatpush1.msra.mxu0 %v515
        %709 = vmatprep.subr.mxu0 %v524
        %710 = vmatpush1.msra.mxu0 %v523
        %711 = vmatprep.subr.mxu0 %v532
        %712 = vmatpush1.msra.mxu0 %v531
        %713 = vmatprep.subr.mxu0 %v540
        %714 = vmatpush1.msra.mxu0 %v539
        %715 = vmatprep.subr.mxu0 %v548
        %716 = vmatpush1.msra.mxu0 %v547
        %717 = vmatprep.subr.mxu0 %v556
        %718 = vmatpush1.msra.mxu0 %v555
        %719 = vmatprep.subr.mxu0 %v564
        %720 = vmatpush1.msra.mxu0 %v563
        %721 = vmatprep.subr.mxu0 %v572
        %722 = vmatpush1.msra.mxu0 %v571
        %723 = vmatprep.subr.mxu0 %v580
        %724 = vmatpush1.msra.mxu0 %v579
        %725 = vmatprep.subr.mxu0 %v588
        %726 = vmatpush1.msra.mxu0 %v587
        %727 = vmatprep.subr.mxu0 %v596
        %728 = vmatpush1.msra.mxu0 %v595
        %729 = vmatprep.subr.mxu0 %v604
        %730 = vmatpush1.msra.mxu0 %v603
        %731 = vmatprep.subr.mxu0 %v612
        %732 = vmatpush1.msra.mxu0 %v611
        %733 = vmatprep.subr.mxu0 %v620
        %734 = vmatpush1.msra.mxu0 %v619
        %735 = vmatprep.subr.mxu0 %v628
        %736 = vmatpush1.msra.mxu0 %v627
        %737 = vmatprep.subr.mxu0 0.0
        %738 = vmatpush1.msra.mxu0 0.0
        %739 = vmatprep.subr.mxu0 0.0
        %740 = vmatpush1.msra.mxu0 0.0
        %741 = vmatprep.subr.mxu0 0.0
        %742 = vmatpush1.msra.mxu0 0.0
        %743 = vmatprep.subr.mxu0 0.0
        %744 = vmatpush1.msra.mxu0 0.0
        %745 = vmatprep.subr.mxu0 0.0
        %746 = vmatpush1.msra.mxu0 0.0
        %747 = vmatprep.subr.mxu0 0.0
        %748 = vmatpush1.msra.mxu0 0.0
        %749 = vmatprep.subr.mxu0 0.0
        %750 = vmatpush1.msra.mxu0 0.0
        %751 = vmatprep.subr.mxu0 0.0
        %752 = vmatpush1.msra.mxu0 0.0
        %753 = vmatprep.subr.mxu0 0.0
        %754 = vmatpush1.msra.mxu0 0.0
        %755 = vmatprep.subr.mxu0 0.0
        %756 = vmatpush1.msra.mxu0 0.0
        %757 = vmatprep.subr.mxu0 0.0
        %758 = vmatpush1.msra.mxu0 0.0
        %759 = vmatprep.subr.mxu0 0.0
        %760 = vmatpush1.msra.mxu0 0.0
        %761 = vmatprep.subr.mxu0 0.0
        %762 = vmatpush1.msra.mxu0 0.0
        %763 = vmatprep.subr.mxu0 0.0
        %764 = vmatpush1.msra.mxu0 0.0
        %765 = vmatprep.subr.mxu0 0.0
        %766 = vmatpush1.msra.mxu0 0.0
        %767 = vmatprep.subr.mxu0 0.0
        %768 = vmatpush1.msra.mxu0 0.0
        %769 = vmatprep.mubr.f32.mxu0 0.0
        %770 = vmatmul.mubr.f32.gmra.mrb[0].mxu0 %v633
        %v771 = vpop.f32.mrb[0].mxu0
        %v772 = vadd.f32 0.0, %v771
        %v773 = vpop.f32.mrb[0].mxu0
        %v774 = vadd.f32 0.0, %v773
        %775 = vdwg.mxu0
        %776 = vmatprep.subr.mxu0 %v510
        %777 = vmatpush1.msra.mxu0 %v509
        %778 = vmatprep.subr.mxu0 %v518
        %779 = vmatpush1.msra.mxu0 %v517
        %780 = vmatprep.subr.mxu0 %v526
        %781 = vmatpush1.msra.mxu0 %v525
        %782 = vmatprep.subr.mxu0 %v534
        %783 = vmatpush1.msra.mxu0 %v533
        %784 = vmatprep.subr.mxu0 %v542
        %785 = vmatpush1.msra.mxu0 %v541
        %786 = vmatprep.subr.mxu0 %v550
        %787 = vmatpush1.msra.mxu0 %v549
        %788 = vmatprep.subr.mxu0 %v558
        %789 = vmatpush1.msra.mxu0 %v557
        %790 = vmatprep.subr.mxu0 %v566
        %791 = vmatpush1.msra.mxu0 %v565
        %792 = vmatprep.subr.mxu0 %v574
        %793 = vmatpush1.msra.mxu0 %v573
        %794 = vmatprep.subr.mxu0 %v582
        %795 = vmatpush1.msra.mxu0 %v581
        %796 = vmatprep.subr.mxu0 %v590
        %797 = vmatpush1.msra.mxu0 %v589
        %798 = vmatprep.subr.mxu0 %v598
        %799 = vmatpush1.msra.mxu0 %v597
        %800 = vmatprep.subr.mxu0 %v606
        %801 = vmatpush1.msra.mxu0 %v605
        %802 = vmatprep.subr.mxu0 %v614
        %803 = vmatpush1.msra.mxu0 %v613
        %804 = vmatprep.subr.mxu0 %v622
        %805 = vmatpush1.msra.mxu0 %v621
        %806 = vmatprep.subr.mxu0 %v630
        %807 = vmatpush1.msra.mxu0 %v629
        %808 = vmatprep.subr.mxu0 0.0
        %809 = vmatpush1.msra.mxu0 0.0
        %810 = vmatprep.subr.mxu0 0.0
        %811 = vmatpush1.msra.mxu0 0.0
        %812 = vmatprep.subr.mxu0 0.0
        %813 = vmatpush1.msra.mxu0 0.0
        %814 = vmatprep.subr.mxu0 0.0
        %815 = vmatpush1.msra.mxu0 0.0
        %816 = vmatprep.subr.mxu0 0.0
        %817 = vmatpush1.msra.mxu0 0.0
        %818 = vmatprep.subr.mxu0 0.0
        %819 = vmatpush1.msra.mxu0 0.0
        %820 = vmatprep.subr.mxu0 0.0
        %821 = vmatpush1.msra.mxu0 0.0
        %822 = vmatprep.subr.mxu0 0.0
        %823 = vmatpush1.msra.mxu0 0.0
        %824 = vmatprep.subr.mxu0 0.0
        %825 = vmatpush1.msra.mxu0 0.0
        %826 = vmatprep.subr.mxu0 0.0
        %827 = vmatpush1.msra.mxu0 0.0
        %828 = vmatprep.subr.mxu0 0.0
        %829 = vmatpush1.msra.mxu0 0.0
        %830 = vmatprep.subr.mxu0 0.0
        %831 = vmatpush1.msra.mxu0 0.0
        %832 = vmatprep.subr.mxu0 0.0
        %833 = vmatpush1.msra.mxu0 0.0
        %834 = vmatprep.subr.mxu0 0.0
        %835 = vmatpush1.msra.mxu0 0.0
        %836 = vmatprep.subr.mxu0 0.0
        %837 = vmatpush1.msra.mxu0 0.0
        %838 = vmatprep.subr.mxu0 0.0
        %839 = vmatpush1.msra.mxu0 0.0
        %840 = vmatprep.mubr.f32.mxu0 0.0
        %841 = vmatmul.mubr.f32.gmra.mrb[0].mxu0 %v633
        %v842 = vpop.f32.mrb[0].mxu0
        %v843 = vadd.f32 0.0, %v842
        %v844 = vpop.f32.mrb[0].mxu0
        %v845 = vadd.f32 0.0, %v844
        %846 = vdwg.mxu0
        %847 = vmatprep.subr.mxu0 %v512
        %848 = vmatpush1.msra.mxu0 %v511
        %849 = vmatprep.subr.mxu0 %v520
        %850 = vmatpush1.msra.mxu0 %v519
        %851 = vmatprep.subr.mxu0 %v528
        %852 = vmatpush1.msra.mxu0 %v527
        %853 = vmatprep.subr.mxu0 %v536
        %854 = vmatpush1.msra.mxu0 %v535
        %855 = vmatprep.subr.mxu0 %v544
        %856 = vmatpush1.msra.mxu0 %v543
        %857 = vmatprep.subr.mxu0 %v552
        %858 = vmatpush1.msra.mxu0 %v551
        %859 = vmatprep.subr.mxu0 %v560
        %860 = vmatpush1.msra.mxu0 %v559
        %861 = vmatprep.subr.mxu0 %v568
        %862 = vmatpush1.msra.mxu0 %v567
        %863 = vmatprep.subr.mxu0 %v576
        %864 = vmatpush1.msra.mxu0 %v575
        %865 = vmatprep.subr.mxu0 %v584
        %866 = vmatpush1.msra.mxu0 %v583
        %867 = vmatprep.subr.mxu0 %v592
        %868 = vmatpush1.msra.mxu0 %v591
        %869 = vmatprep.subr.mxu0 %v600
        %870 = vmatpush1.msra.mxu0 %v599
        %871 = vmatprep.subr.mxu0 %v608
        %872 = vmatpush1.msra.mxu0 %v607
        %873 = vmatprep.subr.mxu0 %v616
        %874 = vmatpush1.msra.mxu0 %v615
        %875 = vmatprep.subr.mxu0 %v624
        %876 = vmatpush1.msra.mxu0 %v623
        %877 = vmatprep.subr.mxu0 %v632
        %878 = vmatpush1.msra.mxu0 %v631
        %879 = vmatprep.subr.mxu0 0.0
        %880 = vmatpush1.msra.mxu0 0.0
        %881 = vmatprep.subr.mxu0 0.0
        %882 = vmatpush1.msra.mxu0 0.0
        %883 = vmatprep.subr.mxu0 0.0
        %884 = vmatpush1.msra.mxu0 0.0
        %885 = vmatprep.subr.mxu0 0.0
        %886 = vmatpush1.msra.mxu0 0.0
        %887 = vmatprep.subr.mxu0 0.0
        %888 = vmatpush1.msra.mxu0 0.0
        %889 = vmatprep.subr.mxu0 0.0
        %890 = vmatpush1.msra.mxu0 0.0
        %891 = vmatprep.subr.mxu0 0.0
        %892 = vmatpush1.msra.mxu0 0.0
        %893 = vmatprep.subr.mxu0 0.0
        %894 = vmatpush1.msra.mxu0 0.0
        %895 = vmatprep.subr.mxu0 0.0
        %896 = vmatpush1.msra.mxu0 0.0
        %897 = vmatprep.subr.mxu0 0.0
        %898 = vmatpush1.msra.mxu0 0.0
        %899 = vmatprep.subr.mxu0 0.0
        %900 = vmatpush1.msra.mxu0 0.0
        %901 = vmatprep.subr.mxu0 0.0
        %902 = vmatpush1.msra.mxu0 0.0
        %903 = vmatprep.subr.mxu0 0.0
        %904 = vmatpush1.msra.mxu0 0.0
        %905 = vmatprep.subr.mxu0 0.0
        %906 = vmatpush1.msra.mxu0 0.0
        %907 = vmatprep.subr.mxu0 0.0
        %908 = vmatpush1.msra.mxu0 0.0
        %909 = vmatprep.subr.mxu0 0.0
        %910 = vmatpush1.msra.mxu0 0.0
        %911 = vmatprep.mubr.f32.mxu0 0.0
        %912 = vmatmul.mubr.f32.gmra.mrb[0].mxu0 %v633
        %v913 = vpop.f32.mrb[0].mxu0
        %v914 = vadd.f32 0.0, %v913
        %v915 = vpop.f32.mrb[0].mxu0
        %v916 = vadd.f32 0.0, %v915
        %917 = vdwg.mxu0
        %v918 = vld [vmem:[%s502] sm:$0x3f]
        %v919 = vld [vmem:[%s502 + $0x8] sm:$0x3f]
        %v920 = vld [vmem:[%s502 + $0x10] sm:$0x3f]
        %v921 = vld [vmem:[%s502 + $0x18] sm:$0x3f]
        %v922 = vld [vmem:[%s502 + $0x20] sm:$0x3f]
        %v923 = vld [vmem:[%s502 + $0x28] sm:$0x3f]
        %v924 = vld [vmem:[%s502 + $0x30] sm:$0x3f]
        %v925 = vld [vmem:[%s502 + $0x38] sm:$0x3f]
        %v926 = vsub.f32 %v701, %v918
        %v927 = vsub.f32 %v703, %v919
        %v928 = vsub.f32 %v772, %v920
        %v929 = vsub.f32 %v774, %v921
        %v930 = vsub.f32 %v843, %v922
        %v931 = vsub.f32 %v845, %v923
        %v932 = vsub.f32 %v914, %v924
        %v933 = vsub.f32 %v916, %v925
        %v934 = vmul.f32 %v926, %v926
        %v935 = vmul.f32 %v927, %v927
        %v936 = vmul.f32 %v928, %v928
        %v937 = vmul.f32 %v929, %v929
        %v938 = vmul.f32 %v930, %v930
        %v939 = vmul.f32 %v931, %v931
        %v940 = vmul.f32 %v932, %v932
        %v941 = vmul.f32 %v933, %v933
        %v950 = vrot.slane %v934, 1
        %v951 = vrot.slane %v935, 1
        %v952 = vrot.slane %v936, 1
        %v953 = vrot.slane %v937, 1
        %v954 = vrot.slane %v938, 1
        %v955 = vrot.slane %v939, 1
        %v956 = vrot.slane %v940, 1
        %v957 = vrot.slane %v941, 1
        %v966 = vadd.f32 %v934, %v950
        %v967 = vadd.f32 %v935, %v951
        %v968 = vadd.f32 %v936, %v952
        %v969 = vadd.f32 %v937, %v953
        %v970 = vadd.f32 %v938, %v954
        %v971 = vadd.f32 %v939, %v955
        %v972 = vadd.f32 %v940, %v956
        %v973 = vadd.f32 %v941, %v957
        %v974 = vrot.slane %v934, 2
        %v975 = vrot.slane %v935, 2
        %v976 = vrot.slane %v936, 2
        %v977 = vrot.slane %v937, 2
        %v978 = vrot.slane %v938, 2
        %v979 = vrot.slane %v939, 2
        %v980 = vrot.slane %v940, 2
        %v981 = vrot.slane %v941, 2
        %v990 = vadd.f32 %v966, %v974
        %v991 = vadd.f32 %v967, %v975
        %v992 = vadd.f32 %v968, %v976
        %v993 = vadd.f32 %v969, %v977
        %v994 = vadd.f32 %v970, %v978
        %v995 = vadd.f32 %v971, %v979
        %v996 = vadd.f32 %v972, %v980
        %v997 = vadd.f32 %v973, %v981
        %v998 = vrsqrt.pop %v990
        %v999 = vmul.f32 %v990, %v998
        %vm1000 = vcmp.eq.f32.partialorder %v990, inf
        %v1001 = vsel %vm1000, %v990, %v999
        %vm1002 = vcmp.eq.f32.partialorder %v990, 0.0
        %v1003 = vand.u32 %v990, 2147483648
        %v1004 = vsel %vm1002, %v1003, %v1001
        %v1005 = vrsqrt.pop %v991
        %v1006 = vmul.f32 %v991, %v1005
        %vm1007 = vcmp.eq.f32.partialorder %v991, inf
        %v1008 = vsel %vm1007, %v991, %v1006
        %vm1009 = vcmp.eq.f32.partialorder %v991, 0.0
        %v1010 = vand.u32 %v991, 2147483648
        %v1011 = vsel %vm1009, %v1010, %v1008
        %v1012 = vrsqrt.pop %v992
        %v1013 = vmul.f32 %v992, %v1012
        %vm1014 = vcmp.eq.f32.partialorder %v992, inf
        %v1015 = vsel %vm1014, %v992, %v1013
        %vm1016 = vcmp.eq.f32.partialorder %v992, 0.0
        %v1017 = vand.u32 %v992, 2147483648
        %v1018 = vsel %vm1016, %v1017, %v1015
        %v1019 = vrsqrt.pop %v993
        %v1020 = vmul.f32 %v993, %v1019
        %vm1021 = vcmp.eq.f32.partialorder %v993, inf
        %v1022 = vsel %vm1021, %v993, %v1020
        %vm1023 = vcmp.eq.f32.partialorder %v993, 0.0
        %v1024 = vand.u32 %v993, 2147483648
        %v1025 = vsel %vm1023, %v1024, %v1022
        %v1026 = vrsqrt.pop %v994
        %v1027 = vmul.f32 %v994, %v1026
        %vm1028 = vcmp.eq.f32.partialorder %v994, inf
        %v1029 = vsel %vm1028, %v994, %v1027
        %vm1030 = vcmp.eq.f32.partialorder %v994, 0.0
        %v1031 = vand.u32 %v994, 2147483648
        %v1032 = vsel %vm1030, %v1031, %v1029
        %v1033 = vrsqrt.pop %v995
        %v1034 = vmul.f32 %v995, %v1033
        %vm1035 = vcmp.eq.f32.partialorder %v995, inf
        %v1036 = vsel %vm1035, %v995, %v1034
        %vm1037 = vcmp.eq.f32.partialorder %v995, 0.0
        %v1038 = vand.u32 %v995, 2147483648
        %v1039 = vsel %vm1037, %v1038, %v1036
        %v1040 = vrsqrt.pop %v996
        %v1041 = vmul.f32 %v996, %v1040
        %vm1042 = vcmp.eq.f32.partialorder %v996, inf
        %v1043 = vsel %vm1042, %v996, %v1041
        %vm1044 = vcmp.eq.f32.partialorder %v996, 0.0
        %v1045 = vand.u32 %v996, 2147483648
        %v1046 = vsel %vm1044, %v1045, %v1043
        %v1047 = vrsqrt.pop %v997
        %v1048 = vmul.f32 %v997, %v1047
        %vm1049 = vcmp.eq.f32.partialorder %v997, inf
        %v1050 = vsel %vm1049, %v997, %v1048
        %vm1051 = vcmp.eq.f32.partialorder %v997, 0.0
        %v1052 = vand.u32 %v997, 2147483648
        %v1053 = vsel %vm1051, %v1052, %v1050
        %v1054 = vld [vmem:[%s4] sm:$0xff]
        %v1055 = vld [vmem:[%s4 + $0x8] sm:$0xff]
        %v1056 = vld [vmem:[%s5] sm:$0xff]
        %v1057 = vld [vmem:[%s5 + $0x8] sm:$0xff]
        %vm1058 = vcmask 48128
        %v1060 = vsel %vm1058, %v1056, 0
        %v1063 = vsel %vm1058, %v1057, 0
        %vm1065 = vcmask 1045504
        %v1067 = vsel %vm1065, %v918, 0
        %v1070 = vsel %vm1065, %v919, 0
        %v1073 = vsel %vm1065, %v920, 0
        %v1076 = vsel %vm1065, %v921, 0
        %v1079 = vsel %vm1065, %v922, 0
        %v1082 = vsel %vm1065, %v923, 0
        %v1085 = vsel %vm1065, %v924, 0
        %v1088 = vsel %vm1065, %v925, 0
        %1090 = vmatprep.subr.mxu0 %v1070
        %1091 = vmatpush1.msra.mxu0 %v1067
        %1092 = vmatprep.subr.mxu0 0.0
        %1093 = vmatpush1.msra.mxu0 0.0
        %1094 = vmatprep.subr.mxu0 0.0
        %1095 = vmatpush1.msra.mxu0 0.0
        %1096 = vmatprep.subr.mxu0 0.0
        %1097 = vmatpush1.msra.mxu0 0.0
        %1098 = vmatprep.subr.mxu0 0.0
        %1099 = vmatpush1.msra.mxu0 0.0
        %1100 = vmatprep.subr.mxu0 0.0
        %1101 = vmatpush1.msra.mxu0 0.0
        %1102 = vmatprep.subr.mxu0 0.0
        %1103 = vmatpush1.msra.mxu0 0.0
        %1104 = vmatprep.subr.mxu0 0.0
        %1105 = vmatpush1.msra.mxu0 0.0
        %1106 = vmatprep.subr.mxu0 0.0
        %1107 = vmatpush1.msra.mxu0 0.0
        %1108 = vmatprep.subr.mxu0 0.0
        %1109 = vmatpush1.msra.mxu0 0.0
        %1110 = vmatprep.subr.mxu0 0.0
        %1111 = vmatpush1.msra.mxu0 0.0
        %1112 = vmatprep.subr.mxu0 0.0
        %1113 = vmatpush1.msra.mxu0 0.0
        %1114 = vmatprep.subr.mxu0 0.0
        %1115 = vmatpush1.msra.mxu0 0.0
        %1116 = vmatprep.subr.mxu0 0.0
        %1117 = vmatpush1.msra.mxu0 0.0
        %1118 = vmatprep.subr.mxu0 0.0
        %1119 = vmatpush1.msra.mxu0 0.0
        %1120 = vmatprep.subr.mxu0 0.0
        %1121 = vmatpush1.msra.mxu0 0.0
        %1122 = vmatprep.subr.mxu0 0.0
        %1123 = vmatpush1.msra.mxu0 0.0
        %1124 = vmatprep.subr.mxu0 0.0
        %1125 = vmatpush1.msra.mxu0 0.0
        %1126 = vmatprep.subr.mxu0 0.0
        %1127 = vmatpush1.msra.mxu0 0.0
        %1128 = vmatprep.subr.mxu0 0.0
        %1129 = vmatpush1.msra.mxu0 0.0
        %1130 = vmatprep.subr.mxu0 0.0
        %1131 = vmatpush1.msra.mxu0 0.0
        %1132 = vmatprep.subr.mxu0 0.0
        %1133 = vmatpush1.msra.mxu0 0.0
        %1134 = vmatprep.subr.mxu0 0.0
        %1135 = vmatpush1.msra.mxu0 0.0
        %1136 = vmatprep.subr.mxu0 0.0
        %1137 = vmatpush1.msra.mxu0 0.0
        %1138 = vmatprep.subr.mxu0 0.0
        %1139 = vmatpush1.msra.mxu0 0.0
        %1140 = vmatprep.subr.mxu0 0.0
        %1141 = vmatpush1.msra.mxu0 0.0
        %1142 = vmatprep.subr.mxu0 0.0
        %1143 = vmatpush1.msra.mxu0 0.0
        %1144 = vmatprep.subr.mxu0 0.0
        %1145 = vmatpush1.msra.mxu0 0.0
        %1146 = vmatprep.subr.mxu0 0.0
        %1147 = vmatpush1.msra.mxu0 0.0
        %1148 = vmatprep.subr.mxu0 0.0
        %1149 = vmatpush1.msra.mxu0 0.0
        %1150 = vmatprep.subr.mxu0 0.0
        %1151 = vmatpush1.msra.mxu0 0.0
        %1152 = vmatprep.subr.mxu0 0.0
        %1153 = vmatpush1.msra.mxu0 0.0
        %1154 = vmatprep.mubr.f32.mxu0 0.0
        %1155 = vmatmul.mubr.f32.gmra.mrb[0].mxu0 %v1060
        %v1156 = vpop.f32.mrb[0].mxu0
        %v1157 = vadd.f32 0.0, %v1156
        %v1158 = vpop.f32.mrb[0].mxu0
        %v1159 = vadd.f32 0.0, %v1158
        %1160 = vmatprep.mubr.f32.mxu0 0.0
        %1161 = vmatmul.mubr.f32.gmra.mrb[0].mxu0 %v1063
        %v1162 = vpop.f32.mrb[0].mxu0
        %v1163 = vadd.f32 0.0, %v1162
        %v1164 = vpop.f32.mrb[0].mxu0
        %v1165 = vadd.f32 0.0, %v1164
        %1166 = vdwg.mxu0
        %1167 = vmatprep.subr.mxu0 %v1076
        %1168 = vmatpush1.msra.mxu0 %v1073
        %1169 = vmatprep.subr.mxu0 0.0
        %1170 = vmatpush1.msra.mxu0 0.0
        %1171 = vmatprep.subr.mxu0 0.0
        %1172 = vmatpush1.msra.mxu0 0.0
        %1173 = vmatprep.subr.mxu0 0.0
        %1174 = vmatpush1.msra.mxu0 0.0
        %1175 = vmatprep.subr.mxu0 0.0
        %1176 = vmatpush1.msra.mxu0 0.0
        %1177 = vmatprep.subr.mxu0 0.0
        %1178 = vmatpush1.msra.mxu0 0.0
        %1179 = vmatprep.subr.mxu0 0.0
        %1180 = vmatpush1.msra.mxu0 0.0
        %1181 = vmatprep.subr.mxu0 0.0
        %1182 = vmatpush1.msra.mxu0 0.0
        %1183 = vmatprep.subr.mxu0 0.0
        %1184 = vmatpush1.msra.mxu0 0.0
        %1185 = vmatprep.subr.mxu0 0.0
        %1186 = vmatpush1.msra.mxu0 0.0
        %1187 = vmatprep.subr.mxu0 0.0
        %1188 = vmatpush1.msra.mxu0 0.0
        %1189 = vmatprep.subr.mxu0 0.0
        %1190 = vmatpush1.msra.mxu0 0.0
        %1191 = vmatprep.subr.mxu0 0.0
        %1192 = vmatpush1.msra.mxu0 0.0
        %1193 = vmatprep.subr.mxu0 0.0
        %1194 = vmatpush1.msra.mxu0 0.0
        %1195 = vmatprep.subr.mxu0 0.0
        %1196 = vmatpush1.msra.mxu0 0.0
        %1197 = vmatprep.subr.mxu0 0.0
        %1198 = vmatpush1.msra.mxu0 0.0
        %1199 = vmatprep.subr.mxu0 0.0
        %1200 = vmatpush1.msra.mxu0 0.0
        %1201 = vmatprep.subr.mxu0 0.0
        %1202 = vmatpush1.msra.mxu0 0.0
        %1203 = vmatprep.subr.mxu0 0.0
        %1204 = vmatpush1.msra.mxu0 0.0
        %1205 = vmatprep.subr.mxu0 0.0
        %1206 = vmatpush1.msra.mxu0 0.0
        %1207 = vmatprep.subr.mxu0 0.0
        %1208 = vmatpush1.msra.mxu0 0.0
        %1209 = vmatprep.subr.mxu0 0.0
        %1210 = vmatpush1.msra.mxu0 0.0
        %1211 = vmatprep.subr.mxu0 0.0
        %1212 = vmatpush1.msra.mxu0 0.0
        %1213 = vmatprep.subr.mxu0 0.0
        %1214 = vmatpush1.msra.mxu0 0.0
        %1215 = vmatprep.subr.mxu0 0.0
        %1216 = vmatpush1.msra.mxu0 0.0
        %1217 = vmatprep.subr.mxu0 0.0
        %1218 = vmatpush1.msra.mxu0 0.0
        %1219 = vmatprep.subr.mxu0 0.0
        %1220 = vmatpush1.msra.mxu0 0.0
        %1221 = vmatprep.subr.mxu0 0.0
        %1222 = vmatpush1.msra.mxu0 0.0
        %1223 = vmatprep.subr.mxu0 0.0
        %1224 = vmatpush1.msra.mxu0 0.0
        %1225 = vmatprep.subr.mxu0 0.0
        %1226 = vmatpush1.msra.mxu0 0.0
        %1227 = vmatprep.subr.mxu0 0.0
        %1228 = vmatpush1.msra.mxu0 0.0
        %1229 = vmatprep.subr.mxu0 0.0
        %1230 = vmatpush1.msra.mxu0 0.0
        %1231 = vmatprep.mubr.f32.mxu0 0.0
        %1232 = vmatmul.mubr.f32.gmra.mrb[0].mxu0 %v1060
        %v1233 = vpop.f32.mrb[0].mxu0
        %v1234 = vadd.f32 0.0, %v1233
        %v1235 = vpop.f32.mrb[0].mxu0
        %v1236 = vadd.f32 0.0, %v1235
        %1237 = vmatprep.mubr.f32.mxu0 0.0
        %1238 = vmatmul.mubr.f32.gmra.mrb[0].mxu0 %v1063
        %v1239 = vpop.f32.mrb[0].mxu0
        %v1240 = vadd.f32 0.0, %v1239
        %v1241 = vpop.f32.mrb[0].mxu0
        %v1242 = vadd.f32 0.0, %v1241
        %1243 = vdwg.mxu0
        %1244 = vmatprep.subr.mxu0 %v1082
        %1245 = vmatpush1.msra.mxu0 %v1079
        %1246 = vmatprep.subr.mxu0 0.0
        %1247 = vmatpush1.msra.mxu0 0.0
        %1248 = vmatprep.subr.mxu0 0.0
        %1249 = vmatpush1.msra.mxu0 0.0
        %1250 = vmatprep.subr.mxu0 0.0
        %1251 = vmatpush1.msra.mxu0 0.0
        %1252 = vmatprep.subr.mxu0 0.0
        %1253 = vmatpush1.msra.mxu0 0.0
        %1254 = vmatprep.subr.mxu0 0.0
        %1255 = vmatpush1.msra.mxu0 0.0
        %1256 = vmatprep.subr.mxu0 0.0
        %1257 = vmatpush1.msra.mxu0 0.0
        %1258 = vmatprep.subr.mxu0 0.0
        %1259 = vmatpush1.msra.mxu0 0.0
        %1260 = vmatprep.subr.mxu0 0.0
        %1261 = vmatpush1.msra.mxu0 0.0
        %1262 = vmatprep.subr.mxu0 0.0
        %1263 = vmatpush1.msra.mxu0 0.0
        %1264 = vmatprep.subr.mxu0 0.0
        %1265 = vmatpush1.msra.mxu0 0.0
        %1266 = vmatprep.subr.mxu0 0.0
        %1267 = vmatpush1.msra.mxu0 0.0
        %1268 = vmatprep.subr.mxu0 0.0
        %1269 = vmatpush1.msra.mxu0 0.0
        %1270 = vmatprep.subr.mxu0 0.0
        %1271 = vmatpush1.msra.mxu0 0.0
        %1272 = vmatprep.subr.mxu0 0.0
        %1273 = vmatpush1.msra.mxu0 0.0
        %1274 = vmatprep.subr.mxu0 0.0
        %1275 = vmatpush1.msra.mxu0 0.0
        %1276 = vmatprep.subr.mxu0 0.0
        %1277 = vmatpush1.msra.mxu0 0.0
        %1278 = vmatprep.subr.mxu0 0.0
        %1279 = vmatpush1.msra.mxu0 0.0
        %1280 = vmatprep.subr.mxu0 0.0
        %1281 = vmatpush1.msra.mxu0 0.0
        %1282 = vmatprep.subr.mxu0 0.0
        %1283 = vmatpush1.msra.mxu0 0.0
        %1284 = vmatprep.subr.mxu0 0.0
        %1285 = vmatpush1.msra.mxu0 0.0
        %1286 = vmatprep.subr.mxu0 0.0
        %1287 = vmatpush1.msra.mxu0 0.0
        %1288 = vmatprep.subr.mxu0 0.0
        %1289 = vmatpush1.msra.mxu0 0.0
        %1290 = vmatprep.subr.mxu0 0.0
        %1291 = vmatpush1.msra.mxu0 0.0
        %1292 = vmatprep.subr.mxu0 0.0
        %1293 = vmatpush1.msra.mxu0 0.0
        %1294 = vmatprep.subr.mxu0 0.0
        %1295 = vmatpush1.msra.mxu0 0.0
        %1296 = vmatprep.subr.mxu0 0.0
        %1297 = vmatpush1.msra.mxu0 0.0
        %1298 = vmatprep.subr.mxu0 0.0
        %1299 = vmatpush1.msra.mxu0 0.0
        %1300 = vmatprep.subr.mxu0 0.0
        %1301 = vmatpush1.msra.mxu0 0.0
        %1302 = vmatprep.subr.mxu0 0.0
        %1303 = vmatpush1.msra.mxu0 0.0
        %1304 = vmatprep.subr.mxu0 0.0
        %1305 = vmatpush1.msra.mxu0 0.0
        %1306 = vmatprep.subr.mxu0 0.0
        %1307 = vmatpush1.msra.mxu0 0.0
        %1308 = vmatprep.mubr.f32.mxu0 0.0
        %1309 = vmatmul.mubr.f32.gmra.mrb[0].mxu0 %v1060
        %v1310 = vpop.f32.mrb[0].mxu0
        %v1311 = vadd.f32 0.0, %v1310
        %v1312 = vpop.f32.mrb[0].mxu0
        %v1313 = vadd.f32 0.0, %v1312
        %1314 = vmatprep.mubr.f32.mxu0 0.0
        %1315 = vmatmul.mubr.f32.gmra.mrb[0].mxu0 %v1063
        %v1316 = vpop.f32.mrb[0].mxu0
        %v1317 = vadd.f32 0.0, %v1316
        %v1318 = vpop.f32.mrb[0].mxu0
        %v1319 = vadd.f32 0.0, %v1318
        %1320 = vdwg.mxu0
        %1321 = vmatprep.subr.mxu0 %v1088
        %1322 = vmatpush1.msra.mxu0 %v1085
        %1323 = vmatprep.subr.mxu0 0.0
        %1324 = vmatpush1.msra.mxu0 0.0
        %1325 = vmatprep.subr.mxu0 0.0
        %1326 = vmatpush1.msra.mxu0 0.0
        %1327 = vmatprep.subr.mxu0 0.0
        %1328 = vmatpush1.msra.mxu0 0.0
        %1329 = vmatprep.subr.mxu0 0.0
        %1330 = vmatpush1.msra.mxu0 0.0
        %1331 = vmatprep.subr.mxu0 0.0
        %1332 = vmatpush1.msra.mxu0 0.0
        %1333 = vmatprep.subr.mxu0 0.0
        %1334 = vmatpush1.msra.mxu0 0.0
        %1335 = vmatprep.subr.mxu0 0.0
        %1336 = vmatpush1.msra.mxu0 0.0
        %1337 = vmatprep.subr.mxu0 0.0
        %1338 = vmatpush1.msra.mxu0 0.0
        %1339 = vmatprep.subr.mxu0 0.0
        %1340 = vmatpush1.msra.mxu0 0.0
        %1341 = vmatprep.subr.mxu0 0.0
        %1342 = vmatpush1.msra.mxu0 0.0
        %1343 = vmatprep.subr.mxu0 0.0
        %1344 = vmatpush1.msra.mxu0 0.0
        %1345 = vmatprep.subr.mxu0 0.0
        %1346 = vmatpush1.msra.mxu0 0.0
        %1347 = vmatprep.subr.mxu0 0.0
        %1348 = vmatpush1.msra.mxu0 0.0
        %1349 = vmatprep.subr.mxu0 0.0
        %1350 = vmatpush1.msra.mxu0 0.0
        %1351 = vmatprep.subr.mxu0 0.0
        %1352 = vmatpush1.msra.mxu0 0.0
        %1353 = vmatprep.subr.mxu0 0.0
        %1354 = vmatpush1.msra.mxu0 0.0
        %1355 = vmatprep.subr.mxu0 0.0
        %1356 = vmatpush1.msra.mxu0 0.0
        %1357 = vmatprep.subr.mxu0 0.0
        %1358 = vmatpush1.msra.mxu0 0.0
        %1359 = vmatprep.subr.mxu0 0.0
        %1360 = vmatpush1.msra.mxu0 0.0
        %1361 = vmatprep.subr.mxu0 0.0
        %1362 = vmatpush1.msra.mxu0 0.0
        %1363 = vmatprep.subr.mxu0 0.0
        %1364 = vmatpush1.msra.mxu0 0.0
        %1365 = vmatprep.subr.mxu0 0.0
        %1366 = vmatpush1.msra.mxu0 0.0
        %1367 = vmatprep.subr.mxu0 0.0
        %1368 = vmatpush1.msra.mxu0 0.0
        %1369 = vmatprep.subr.mxu0 0.0
        %1370 = vmatpush1.msra.mxu0 0.0
        %1371 = vmatprep.subr.mxu0 0.0
        %1372 = vmatpush1.msra.mxu0 0.0
        %1373 = vmatprep.subr.mxu0 0.0
        %1374 = vmatpush1.msra.mxu0 0.0
        %1375 = vmatprep.subr.mxu0 0.0
        %1376 = vmatpush1.msra.mxu0 0.0
        %1377 = vmatprep.subr.mxu0 0.0
        %1378 = vmatpush1.msra.mxu0 0.0
        %1379 = vmatprep.subr.mxu0 0.0
        %1380 = vmatpush1.msra.mxu0 0.0
        %1381 = vmatprep.subr.mxu0 0.0
        %1382 = vmatpush1.msra.mxu0 0.0
        %1383 = vmatprep.subr.mxu0 0.0
        %1384 = vmatpush1.msra.mxu0 0.0
        %1385 = vmatprep.mubr.f32.mxu0 0.0
        %1386 = vmatmul.mubr.f32.gmra.mrb[0].mxu0 %v1060
        %v1387 = vpop.f32.mrb[0].mxu0
        %v1388 = vadd.f32 0.0, %v1387
        %v1389 = vpop.f32.mrb[0].mxu0
        %v1390 = vadd.f32 0.0, %v1389
        %1391 = vmatprep.mubr.f32.mxu0 0.0
        %1392 = vmatmul.mubr.f32.gmra.mrb[0].mxu0 %v1063
        %v1393 = vpop.f32.mrb[0].mxu0
        %v1394 = vadd.f32 0.0, %v1393
        %v1395 = vpop.f32.mrb[0].mxu0
        %v1396 = vadd.f32 0.0, %v1395
        %1397 = vdwg.mxu0
        %v1399 = vsel %vm1058, %v1054, 0
        %v1402 = vsel %vm1058, %v1055, 0
        %v1405 = vsel %vm1065, %v701, 0
        %v1408 = vsel %vm1065, %v703, 0
        %v1411 = vsel %vm1065, %v772, 0
        %v1414 = vsel %vm1065, %v774, 0
        %v1417 = vsel %vm1065, %v843, 0
        %v1420 = vsel %vm1065, %v845, 0
        %v1423 = vsel %vm1065, %v914, 0
        %v1426 = vsel %vm1065, %v916, 0
        %1428 = vmatprep.subr.mxu0 %v1408
        %1429 = vmatpush1.msra.mxu0 %v1405
        %1430 = vmatprep.subr.mxu0 0.0
        %1431 = vmatpush1.msra.mxu0 0.0
        %1432 = vmatprep.subr.mxu0 0.0
        %1433 = vmatpush1.msra.mxu0 0.0
        %1434 = vmatprep.subr.mxu0 0.0
        %1435 = vmatpush1.msra.mxu0 0.0
        %1436 = vmatprep.subr.mxu0 0.0
        %1437 = vmatpush1.msra.mxu0 0.0
        %1438 = vmatprep.subr.mxu0 0.0
        %1439 = vmatpush1.msra.mxu0 0.0
        %1440 = vmatprep.subr.mxu0 0.0
        %1441 = vmatpush1.msra.mxu0 0.0
        %1442 = vmatprep.subr.mxu0 0.0
        %1443 = vmatpush1.msra.mxu0 0.0
        %1444 = vmatprep.subr.mxu0 0.0
        %1445 = vmatpush1.msra.mxu0 0.0
        %1446 = vmatprep.subr.mxu0 0.0
        %1447 = vmatpush1.msra.mxu0 0.0
        %1448 = vmatprep.subr.mxu0 0.0
        %1449 = vmatpush1.msra.mxu0 0.0
        %1450 = vmatprep.subr.mxu0 0.0
        %1451 = vmatpush1.msra.mxu0 0.0
        %1452 = vmatprep.subr.mxu0 0.0
        %1453 = vmatpush1.msra.mxu0 0.0
        %1454 = vmatprep.subr.mxu0 0.0
        %1455 = vmatpush1.msra.mxu0 0.0
        %1456 = vmatprep.subr.mxu0 0.0
        %1457 = vmatpush1.msra.mxu0 0.0
        %1458 = vmatprep.subr.mxu0 0.0
        %1459 = vmatpush1.msra.mxu0 0.0
        %1460 = vmatprep.subr.mxu0 0.0
        %1461 = vmatpush1.msra.mxu0 0.0
        %1462 = vmatprep.subr.mxu0 0.0
        %1463 = vmatpush1.msra.mxu0 0.0
        %1464 = vmatprep.subr.mxu0 0.0
        %1465 = vmatpush1.msra.mxu0 0.0
        %1466 = vmatprep.subr.mxu0 0.0
        %1467 = vmatpush1.msra.mxu0 0.0
        %1468 = vmatprep.subr.mxu0 0.0
        %1469 = vmatpush1.msra.mxu0 0.0
        %1470 = vmatprep.subr.mxu0 0.0
        %1471 = vmatpush1.msra.mxu0 0.0
        %1472 = vmatprep.subr.mxu0 0.0
        %1473 = vmatpush1.msra.mxu0 0.0
        %1474 = vmatprep.subr.mxu0 0.0
        %1475 = vmatpush1.msra.mxu0 0.0
        %1476 = vmatprep.subr.mxu0 0.0
        %1477 = vmatpush1.msra.mxu0 0.0
        %1478 = vmatprep.subr.mxu0 0.0
        %1479 = vmatpush1.msra.mxu0 0.0
        %1480 = vmatprep.subr.mxu0 0.0
        %1481 = vmatpush1.msra.mxu0 0.0
        %1482 = vmatprep.subr.mxu0 0.0
        %1483 = vmatpush1.msra.mxu0 0.0
        %1484 = vmatprep.subr.mxu0 0.0
        %1485 = vmatpush1.msra.mxu0 0.0
        %1486 = vmatprep.subr.mxu0 0.0
        %1487 = vmatpush1.msra.mxu0 0.0
        %1488 = vmatprep.subr.mxu0 0.0
        %1489 = vmatpush1.msra.mxu0 0.0
        %1490 = vmatprep.subr.mxu0 0.0
        %1491 = vmatpush1.msra.mxu0 0.0
        %1492 = vmatprep.mubr.f32.mxu0 0.0
        %1493 = vmatmul.mubr.f32.gmra.mrb[0].mxu0 %v1399
        %v1494 = vpop.f32.mrb[0].mxu0
        %v1495 = vadd.f32 %v1157, %v1494
        %v1496 = vpop.f32.mrb[0].mxu0
        %v1497 = vadd.f32 %v1159, %v1496
        %1498 = vmatprep.mubr.f32.mxu0 0.0
        %1499 = vmatmul.mubr.f32.gmra.mrb[0].mxu0 %v1402
        %v1500 = vpop.f32.mrb[0].mxu0
        %v1501 = vadd.f32 %v1163, %v1500
        %v1502 = vpop.f32.mrb[0].mxu0
        %v1503 = vadd.f32 %v1165, %v1502
        %1504 = vdwg.mxu0
        %1505 = vmatprep.subr.mxu0 %v1414
        %1506 = vmatpush1.msra.mxu0 %v1411
        %1507 = vmatprep.subr.mxu0 0.0
        %1508 = vmatpush1.msra.mxu0 0.0
        %1509 = vmatprep.subr.mxu0 0.0
        %1510 = vmatpush1.msra.mxu0 0.0
        %1511 = vmatprep.subr.mxu0 0.0
        %1512 = vmatpush1.msra.mxu0 0.0
        %1513 = vmatprep.subr.mxu0 0.0
        %1514 = vmatpush1.msra.mxu0 0.0
        %1515 = vmatprep.subr.mxu0 0.0
        %1516 = vmatpush1.msra.mxu0 0.0
        %1517 = vmatprep.subr.mxu0 0.0
        %1518 = vmatpush1.msra.mxu0 0.0
        %1519 = vmatprep.subr.mxu0 0.0
        %1520 = vmatpush1.msra.mxu0 0.0
        %1521 = vmatprep.subr.mxu0 0.0
        %1522 = vmatpush1.msra.mxu0 0.0
        %1523 = vmatprep.subr.mxu0 0.0
        %1524 = vmatpush1.msra.mxu0 0.0
        %1525 = vmatprep.subr.mxu0 0.0
        %1526 = vmatpush1.msra.mxu0 0.0
        %1527 = vmatprep.subr.mxu0 0.0
        %1528 = vmatpush1.msra.mxu0 0.0
        %1529 = vmatprep.subr.mxu0 0.0
        %1530 = vmatpush1.msra.mxu0 0.0
        %1531 = vmatprep.subr.mxu0 0.0
        %1532 = vmatpush1.msra.mxu0 0.0
        %1533 = vmatprep.subr.mxu0 0.0
        %1534 = vmatpush1.msra.mxu0 0.0
        %1535 = vmatprep.subr.mxu0 0.0
        %1536 = vmatpush1.msra.mxu0 0.0
        %1537 = vmatprep.subr.mxu0 0.0
        %1538 = vmatpush1.msra.mxu0 0.0
        %1539 = vmatprep.subr.mxu0 0.0
        %1540 = vmatpush1.msra.mxu0 0.0
        %1541 = vmatprep.subr.mxu0 0.0
        %1542 = vmatpush1.msra.mxu0 0.0
        %1543 = vmatprep.subr.mxu0 0.0
        %1544 = vmatpush1.msra.mxu0 0.0
        %1545 = vmatprep.subr.mxu0 0.0
        %1546 = vmatpush1.msra.mxu0 0.0
        %1547 = vmatprep.subr.mxu0 0.0
        %1548 = vmatpush1.msra.mxu0 0.0
        %1549 = vmatprep.subr.mxu0 0.0
        %1550 = vmatpush1.msra.mxu0 0.0
        %1551 = vmatprep.subr.mxu0 0.0
        %1552 = vmatpush1.msra.mxu0 0.0
        %1553 = vmatprep.subr.mxu0 0.0
        %1554 = vmatpush1.msra.mxu0 0.0
        %1555 = vmatprep.subr.mxu0 0.0
        %1556 = vmatpush1.msra.mxu0 0.0
        %1557 = vmatprep.subr.mxu0 0.0
        %1558 = vmatpush1.msra.mxu0 0.0
        %1559 = vmatprep.subr.mxu0 0.0
        %1560 = vmatpush1.msra.mxu0 0.0
        %1561 = vmatprep.subr.mxu0 0.0
        %1562 = vmatpush1.msra.mxu0 0.0
        %1563 = vmatprep.subr.mxu0 0.0
        %1564 = vmatpush1.msra.mxu0 0.0
        %1565 = vmatprep.subr.mxu0 0.0
        %1566 = vmatpush1.msra.mxu0 0.0
        %1567 = vmatprep.subr.mxu0 0.0
        %1568 = vmatpush1.msra.mxu0 0.0
        %1569 = vmatprep.mubr.f32.mxu0 0.0
        %1570 = vmatmul.mubr.f32.gmra.mrb[0].mxu0 %v1399
        %v1571 = vpop.f32.mrb[0].mxu0
        %v1572 = vadd.f32 %v1234, %v1571
        %v1573 = vpop.f32.mrb[0].mxu0
        %v1574 = vadd.f32 %v1236, %v1573
        %1575 = vmatprep.mubr.f32.mxu0 0.0
        %1576 = vmatmul.mubr.f32.gmra.mrb[0].mxu0 %v1402
        %v1577 = vpop.f32.mrb[0].mxu0
        %v1578 = vadd.f32 %v1240, %v1577
        %v1579 = vpop.f32.mrb[0].mxu0
        %v1580 = vadd.f32 %v1242, %v1579
        %1581 = vdwg.mxu0
        %1582 = vmatprep.subr.mxu0 %v1420
        %1583 = vmatpush1.msra.mxu0 %v1417
        %1584 = vmatprep.subr.mxu0 0.0
        %1585 = vmatpush1.msra.mxu0 0.0
        %1586 = vmatprep.subr.mxu0 0.0
        %1587 = vmatpush1.msra.mxu0 0.0
        %1588 = vmatprep.subr.mxu0 0.0
        %1589 = vmatpush1.msra.mxu0 0.0
        %1590 = vmatprep.subr.mxu0 0.0
        %1591 = vmatpush1.msra.mxu0 0.0
        %1592 = vmatprep.subr.mxu0 0.0
        %1593 = vmatpush1.msra.mxu0 0.0
        %1594 = vmatprep.subr.mxu0 0.0
        %1595 = vmatpush1.msra.mxu0 0.0
        %1596 = vmatprep.subr.mxu0 0.0
        %1597 = vmatpush1.msra.mxu0 0.0
        %1598 = vmatprep.subr.mxu0 0.0
        %1599 = vmatpush1.msra.mxu0 0.0
        %1600 = vmatprep.subr.mxu0 0.0
        %1601 = vmatpush1.msra.mxu0 0.0
        %1602 = vmatprep.subr.mxu0 0.0
        %1603 = vmatpush1.msra.mxu0 0.0
        %1604 = vmatprep.subr.mxu0 0.0
        %1605 = vmatpush1.msra.mxu0 0.0
        %1606 = vmatprep.subr.mxu0 0.0
        %1607 = vmatpush1.msra.mxu0 0.0
        %1608 = vmatprep.subr.mxu0 0.0
        %1609 = vmatpush1.msra.mxu0 0.0
        %1610 = vmatprep.subr.mxu0 0.0
        %1611 = vmatpush1.msra.mxu0 0.0
        %1612 = vmatprep.subr.mxu0 0.0
        %1613 = vmatpush1.msra.mxu0 0.0
        %1614 = vmatprep.subr.mxu0 0.0
        %1615 = vmatpush1.msra.mxu0 0.0
        %1616 = vmatprep.subr.mxu0 0.0
        %1617 = vmatpush1.msra.mxu0 0.0
        %1618 = vmatprep.subr.mxu0 0.0
        %1619 = vmatpush1.msra.mxu0 0.0
        %1620 = vmatprep.subr.mxu0 0.0
        %1621 = vmatpush1.msra.mxu0 0.0
        %1622 = vmatprep.subr.mxu0 0.0
        %1623 = vmatpush1.msra.mxu0 0.0
        %1624 = vmatprep.subr.mxu0 0.0
        %1625 = vmatpush1.msra.mxu0 0.0
        %1626 = vmatprep.subr.mxu0 0.0
        %1627 = vmatpush1.msra.mxu0 0.0
        %1628 = vmatprep.subr.mxu0 0.0
        %1629 = vmatpush1.msra.mxu0 0.0
        %1630 = vmatprep.subr.mxu0 0.0
        %1631 = vmatpush1.msra.mxu0 0.0
        %1632 = vmatprep.subr.mxu0 0.0
        %1633 = vmatpush1.msra.mxu0 0.0
        %1634 = vmatprep.subr.mxu0 0.0
        %1635 = vmatpush1.msra.mxu0 0.0
        %1636 = vmatprep.subr.mxu0 0.0
        %1637 = vmatpush1.msra.mxu0 0.0
        %1638 = vmatprep.subr.mxu0 0.0
        %1639 = vmatpush1.msra.mxu0 0.0
        %1640 = vmatprep.subr.mxu0 0.0
        %1641 = vmatpush1.msra.mxu0 0.0
        %1642 = vmatprep.subr.mxu0 0.0
        %1643 = vmatpush1.msra.mxu0 0.0
        %1644 = vmatprep.subr.mxu0 0.0
        %1645 = vmatpush1.msra.mxu0 0.0
        %1646 = vmatprep.mubr.f32.mxu0 0.0
        %1647 = vmatmul.mubr.f32.gmra.mrb[0].mxu0 %v1399
        %v1648 = vpop.f32.mrb[0].mxu0
        %v1649 = vadd.f32 %v1311, %v1648
        %v1650 = vpop.f32.mrb[0].mxu0
        %v1651 = vadd.f32 %v1313, %v1650
        %1652 = vmatprep.mubr.f32.mxu0 0.0
        %1653 = vmatmul.mubr.f32.gmra.mrb[0].mxu0 %v1402
        %v1654 = vpop.f32.mrb[0].mxu0
        %v1655 = vadd.f32 %v1317, %v1654
        %v1656 = vpop.f32.mrb[0].mxu0
        %v1657 = vadd.f32 %v1319, %v1656
        %1658 = vdwg.mxu0
        %1659 = vmatprep.subr.mxu0 %v1426
        %1660 = vmatpush1.msra.mxu0 %v1423
        %1661 = vmatprep.subr.mxu0 0.0
        %1662 = vmatpush1.msra.mxu0 0.0
        %1663 = vmatprep.subr.mxu0 0.0
        %1664 = vmatpush1.msra.mxu0 0.0
        %1665 = vmatprep.subr.mxu0 0.0
        %1666 = vmatpush1.msra.mxu0 0.0
        %1667 = vmatprep.subr.mxu0 0.0
        %1668 = vmatpush1.msra.mxu0 0.0
        %1669 = vmatprep.subr.mxu0 0.0
        %1670 = vmatpush1.msra.mxu0 0.0
        %1671 = vmatprep.subr.mxu0 0.0
        %1672 = vmatpush1.msra.mxu0 0.0
        %1673 = vmatprep.subr.mxu0 0.0
        %1674 = vmatpush1.msra.mxu0 0.0
        %1675 = vmatprep.subr.mxu0 0.0
        %1676 = vmatpush1.msra.mxu0 0.0
        %1677 = vmatprep.subr.mxu0 0.0
        %1678 = vmatpush1.msra.mxu0 0.0
        %1679 = vmatprep.subr.mxu0 0.0
        %1680 = vmatpush1.msra.mxu0 0.0
        %1681 = vmatprep.subr.mxu0 0.0
        %1682 = vmatpush1.msra.mxu0 0.0
        %1683 = vmatprep.subr.mxu0 0.0
        %1684 = vmatpush1.msra.mxu0 0.0
        %1685 = vmatprep.subr.mxu0 0.0
        %1686 = vmatpush1.msra.mxu0 0.0
        %1687 = vmatprep.subr.mxu0 0.0
        %1688 = vmatpush1.msra.mxu0 0.0
        %1689 = vmatprep.subr.mxu0 0.0
        %1690 = vmatpush1.msra.mxu0 0.0
        %1691 = vmatprep.subr.mxu0 0.0
        %1692 = vmatpush1.msra.mxu0 0.0
        %1693 = vmatprep.subr.mxu0 0.0
        %1694 = vmatpush1.msra.mxu0 0.0
        %1695 = vmatprep.subr.mxu0 0.0
        %1696 = vmatpush1.msra.mxu0 0.0
        %1697 = vmatprep.subr.mxu0 0.0
        %1698 = vmatpush1.msra.mxu0 0.0
        %1699 = vmatprep.subr.mxu0 0.0
        %1700 = vmatpush1.msra.mxu0 0.0
        %1701 = vmatprep.subr.mxu0 0.0
        %1702 = vmatpush1.msra.mxu0 0.0
        %1703 = vmatprep.subr.mxu0 0.0
        %1704 = vmatpush1.msra.mxu0 0.0
        %1705 = vmatprep.subr.mxu0 0.0
        %1706 = vmatpush1.msra.mxu0 0.0
        %1707 = vmatprep.subr.mxu0 0.0
        %1708 = vmatpush1.msra.mxu0 0.0
        %1709 = vmatprep.subr.mxu0 0.0
        %1710 = vmatpush1.msra.mxu0 0.0
        %1711 = vmatprep.subr.mxu0 0.0
        %1712 = vmatpush1.msra.mxu0 0.0
        %1713 = vmatprep.subr.mxu0 0.0
        %1714 = vmatpush1.msra.mxu0 0.0
        %1715 = vmatprep.subr.mxu0 0.0
        %1716 = vmatpush1.msra.mxu0 0.0
        %1717 = vmatprep.subr.mxu0 0.0
        %1718 = vmatpush1.msra.mxu0 0.0
        %1719 = vmatprep.subr.mxu0 0.0
        %1720 = vmatpush1.msra.mxu0 0.0
        %1721 = vmatprep.subr.mxu0 0.0
        %1722 = vmatpush1.msra.mxu0 0.0
        %1723 = vmatprep.mubr.f32.mxu0 0.0
        %1724 = vmatmul.mubr.f32.gmra.mrb[0].mxu0 %v1399
        %v1725 = vpop.f32.mrb[0].mxu0
        %v1726 = vadd.f32 %v1388, %v1725
        %v1727 = vpop.f32.mrb[0].mxu0
        %v1728 = vadd.f32 %v1390, %v1727
        %1729 = vmatprep.mubr.f32.mxu0 0.0
        %1730 = vmatmul.mubr.f32.gmra.mrb[0].mxu0 %v1402
        %v1731 = vpop.f32.mrb[0].mxu0
        %v1732 = vadd.f32 %v1394, %v1731
        %v1733 = vpop.f32.mrb[0].mxu0
        %v1734 = vadd.f32 %v1396, %v1733
        %1735 = vdwg.mxu0
        %v1736 = vld [vmem:[%s6] sm:$0xff]
        %v1737 = vld [vmem:[%s6 + $0x8] sm:$0xff]
        %1739 = vset.pattern.permute.xlu0 0
        %1740 = vperm.xlu0 %1739, %v1736
        %v1741 = vpop.permute.xlu0 %1740
        %1744 = vset.pattern.permute.xlu0 0
        %1745 = vperm.xlu0 %1744, %v1737
        %v1746 = vpop.permute.xlu0 %1745
        %v1748 = vlaneseq
        %v1749 = vshrl.u32 %v1748, 7
        %v1750 = vsub.s32 0, %v1749
        %v1751 = vrot.slane %v1004, %v1750
        %v1752 = vlaneseq
        %v1753 = vshrl.u32 %v1752, 7
        %v1754 = vsub.s32 0, %v1753
        %v1755 = vrot.slane %v1011, %v1754
        %v1756 = vlaneseq
        %v1757 = vshrl.u32 %v1756, 7
        %v1758 = vsub.s32 0, %v1757
        %v1759 = vrot.slane %v1018, %v1758
        %v1760 = vlaneseq
        %v1761 = vshrl.u32 %v1760, 7
        %v1762 = vsub.s32 0, %v1761
        %v1763 = vrot.slane %v1025, %v1762
        %v1764 = vlaneseq
        %v1765 = vshrl.u32 %v1764, 7
        %v1766 = vsub.s32 0, %v1765
        %v1767 = vrot.slane %v1032, %v1766
        %v1768 = vlaneseq
        %v1769 = vshrl.u32 %v1768, 7
        %v1770 = vsub.s32 0, %v1769
        %v1771 = vrot.slane %v1039, %v1770
        %v1772 = vlaneseq
        %v1773 = vshrl.u32 %v1772, 7
        %v1774 = vsub.s32 0, %v1773
        %v1775 = vrot.slane %v1046, %v1774
        %v1776 = vlaneseq
        %v1777 = vshrl.u32 %v1776, 7
        %v1778 = vsub.s32 0, %v1777
        %v1779 = vrot.slane %v1053, %v1778
        %v1780 = vmul.f32 %v1741, %v1751
        %v1781 = vmul.f32 %v1741, %v1755
        %v1782 = vmul.f32 %v1741, %v1759
        %v1783 = vmul.f32 %v1741, %v1763
        %v1784 = vmul.f32 %v1741, %v1767
        %v1785 = vmul.f32 %v1741, %v1771
        %v1786 = vmul.f32 %v1741, %v1775
        %v1787 = vmul.f32 %v1741, %v1779
        %v1788 = vmul.f32 %v1746, %v1751
        %v1789 = vmul.f32 %v1746, %v1755
        %v1790 = vmul.f32 %v1746, %v1759
        %v1791 = vmul.f32 %v1746, %v1763
        %v1792 = vmul.f32 %v1746, %v1767
        %v1793 = vmul.f32 %v1746, %v1771
        %v1794 = vmul.f32 %v1746, %v1775
        %v1795 = vmul.f32 %v1746, %v1779
        %v1796 = vadd.f32 %v1495, %v1780
        %v1797 = vadd.f32 %v1497, %v1781
        %v1798 = vadd.f32 %v1572, %v1782
        %v1799 = vadd.f32 %v1574, %v1783
        %v1800 = vadd.f32 %v1649, %v1784
        %v1801 = vadd.f32 %v1651, %v1785
        %v1802 = vadd.f32 %v1726, %v1786
        %v1803 = vadd.f32 %v1728, %v1787
        %v1804 = vadd.f32 %v1501, %v1788
        %v1805 = vadd.f32 %v1503, %v1789
        %v1806 = vadd.f32 %v1578, %v1790
        %v1807 = vadd.f32 %v1580, %v1791
        %v1808 = vadd.f32 %v1655, %v1792
        %v1809 = vadd.f32 %v1657, %v1793
        %v1810 = vadd.f32 %v1732, %v1794
        %v1811 = vadd.f32 %v1734, %v1795
        %v1812 = vld [vmem:[%s7] sm:$0xff]
        %v1813 = vld [vmem:[%s7 + $0x8] sm:$0xff]
        %1815 = vset.pattern.permute.xlu0 0
        %1816 = vperm.xlu0 %1815, %v1812
        %v1817 = vpop.permute.xlu0 %1816
        %1820 = vset.pattern.permute.xlu0 0
        %1821 = vperm.xlu0 %1820, %v1813
        %v1822 = vpop.permute.xlu0 %1821
        %v1824 = vlaneseq
        %v1825 = vshrl.u32 %v1824, 7
        %v1826 = vsub.s32 3, %v1825
        %v1827 = vrot.slane %v1004, %v1826
        %v1828 = vlaneseq
        %v1829 = vshrl.u32 %v1828, 7
        %v1830 = vsub.s32 3, %v1829
        %v1831 = vrot.slane %v1011, %v1830
        %v1832 = vlaneseq
        %v1833 = vshrl.u32 %v1832, 7
        %v1834 = vsub.s32 3, %v1833
        %v1835 = vrot.slane %v1018, %v1834
        %v1836 = vlaneseq
        %v1837 = vshrl.u32 %v1836, 7
        %v1838 = vsub.s32 3, %v1837
        %v1839 = vrot.slane %v1025, %v1838
        %v1840 = vlaneseq
        %v1841 = vshrl.u32 %v1840, 7
        %v1842 = vsub.s32 3, %v1841
        %v1843 = vrot.slane %v1032, %v1842
        %v1844 = vlaneseq
        %v1845 = vshrl.u32 %v1844, 7
        %v1846 = vsub.s32 3, %v1845
        %v1847 = vrot.slane %v1039, %v1846
        %v1848 = vlaneseq
        %v1849 = vshrl.u32 %v1848, 7
        %v1850 = vsub.s32 3, %v1849
        %v1851 = vrot.slane %v1046, %v1850
        %v1852 = vlaneseq
        %v1853 = vshrl.u32 %v1852, 7
        %v1854 = vsub.s32 3, %v1853
        %v1855 = vrot.slane %v1053, %v1854
        %v1856 = vmul.f32 %v1817, %v1827
        %v1857 = vmul.f32 %v1817, %v1831
        %v1858 = vmul.f32 %v1817, %v1835
        %v1859 = vmul.f32 %v1817, %v1839
        %v1860 = vmul.f32 %v1817, %v1843
        %v1861 = vmul.f32 %v1817, %v1847
        %v1862 = vmul.f32 %v1817, %v1851
        %v1863 = vmul.f32 %v1817, %v1855
        %v1864 = vmul.f32 %v1822, %v1827
        %v1865 = vmul.f32 %v1822, %v1831
        %v1866 = vmul.f32 %v1822, %v1835
        %v1867 = vmul.f32 %v1822, %v1839
        %v1868 = vmul.f32 %v1822, %v1843
        %v1869 = vmul.f32 %v1822, %v1847
        %v1870 = vmul.f32 %v1822, %v1851
        %v1871 = vmul.f32 %v1822, %v1855
        %v1872 = vadd.f32 %v1796, %v1856
        %v1873 = vadd.f32 %v1797, %v1857
        %v1874 = vadd.f32 %v1798, %v1858
        %v1875 = vadd.f32 %v1799, %v1859
        %v1876 = vadd.f32 %v1800, %v1860
        %v1877 = vadd.f32 %v1801, %v1861
        %v1878 = vadd.f32 %v1802, %v1862
        %v1879 = vadd.f32 %v1803, %v1863
        %v1880 = vadd.f32 %v1804, %v1864
        %v1881 = vadd.f32 %v1805, %v1865
        %v1882 = vadd.f32 %v1806, %v1866
        %v1883 = vadd.f32 %v1807, %v1867
        %v1884 = vadd.f32 %v1808, %v1868
        %v1885 = vadd.f32 %v1809, %v1869
        %v1886 = vadd.f32 %v1810, %v1870
        %v1887 = vadd.f32 %v1811, %v1871
        %v1888 = vld [vmem:[%s8] sm:$0xff]
        %v1889 = vld [vmem:[%s8 + $0x8] sm:$0xff]
        %1891 = vset.pattern.permute.xlu0 0
        %1892 = vperm.xlu0 %1891, %v1888
        %v1893 = vpop.permute.xlu0 %1892
        %1896 = vset.pattern.permute.xlu0 0
        %1897 = vperm.xlu0 %1896, %v1889
        %v1898 = vpop.permute.xlu0 %1897
        %v1900 = vadd.f32 %v1872, %v1893
        %v1901 = vadd.f32 %v1873, %v1893
        %v1902 = vadd.f32 %v1874, %v1893
        %v1903 = vadd.f32 %v1875, %v1893
        %v1904 = vadd.f32 %v1876, %v1893
        %v1905 = vadd.f32 %v1877, %v1893
        %v1906 = vadd.f32 %v1878, %v1893
        %v1907 = vadd.f32 %v1879, %v1893
        %v1908 = vadd.f32 %v1880, %v1898
        %v1909 = vadd.f32 %v1881, %v1898
        %v1910 = vadd.f32 %v1882, %v1898
        %v1911 = vadd.f32 %v1883, %v1898
        %v1912 = vadd.f32 %v1884, %v1898
        %v1913 = vadd.f32 %v1885, %v1898
        %v1914 = vadd.f32 %v1886, %v1898
        %v1915 = vadd.f32 %v1887, %v1898
        %v1916 = vmax.f32 %v1900, 0.0
        %v1917 = vmax.f32 %v1901, 0.0
        %v1918 = vmax.f32 %v1902, 0.0
        %v1919 = vmax.f32 %v1903, 0.0
        %v1920 = vmax.f32 %v1904, 0.0
        %v1921 = vmax.f32 %v1905, 0.0
        %v1922 = vmax.f32 %v1906, 0.0
        %v1923 = vmax.f32 %v1907, 0.0
        %v1924 = vmax.f32 %v1908, 0.0
        %v1925 = vmax.f32 %v1909, 0.0
        %v1926 = vmax.f32 %v1910, 0.0
        %v1927 = vmax.f32 %v1911, 0.0
        %v1928 = vmax.f32 %v1912, 0.0
        %v1929 = vmax.f32 %v1913, 0.0
        %v1930 = vmax.f32 %v1914, 0.0
        %v1931 = vmax.f32 %v1915, 0.0
        %v1932 = vld [vmem:[%s9] sm:$0xff]
        %v1933 = vld [vmem:[%s9 + $0x8] sm:$0xff]
        %v1934 = vld [vmem:[%s10] sm:$0xff]
        %v1935 = vld [vmem:[%s10 + $0x8] sm:$0xff]
        %1937 = vset.pattern.permute.xlu0 0
        %1938 = vperm.xlu0 %1937, %v1934
        %v1939 = vpop.permute.xlu0 %1938
        %1942 = vset.pattern.permute.xlu0 0
        %1943 = vperm.xlu0 %1942, %v1935
        %v1944 = vpop.permute.xlu0 %1943
        %vm1946 = vcmask 130048
        %v1948 = vsel %vm1946, %v1932, 0
        %v1951 = vsel %vm1946, %v1933, 0
        %1953 = vmatprep.subr.mxu0 %v1917
        %1954 = vmatpush1.msra.mxu0 %v1916
        %1955 = vmatprep.subr.mxu0 %v1925
        %1956 = vmatpush1.msra.mxu0 %v1924
        %1957 = vmatprep.subr.mxu0 0.0
        %1958 = vmatpush1.msra.mxu0 0.0
        %1959 = vmatprep.subr.mxu0 0.0
        %1960 = vmatpush1.msra.mxu0 0.0
        %1961 = vmatprep.subr.mxu0 0.0
        %1962 = vmatpush1.msra.mxu0 0.0
        %1963 = vmatprep.subr.mxu0 0.0
        %1964 = vmatpush1.msra.mxu0 0.0
        %1965 = vmatprep.subr.mxu0 0.0
        %1966 = vmatpush1.msra.mxu0 0.0
        %1967 = vmatprep.subr.mxu0 0.0
        %1968 = vmatpush1.msra.mxu0 0.0
        %1969 = vmatprep.subr.mxu0 0.0
        %1970 = vmatpush1.msra.mxu0 0.0
        %1971 = vmatprep.subr.mxu0 0.0
        %1972 = vmatpush1.msra.mxu0 0.0
        %1973 = vmatprep.subr.mxu0 0.0
        %1974 = vmatpush1.msra.mxu0 0.0
        %1975 = vmatprep.subr.mxu0 0.0
        %1976 = vmatpush1.msra.mxu0 0.0
        %1977 = vmatprep.subr.mxu0 0.0
        %1978 = vmatpush1.msra.mxu0 0.0
        %1979 = vmatprep.subr.mxu0 0.0
        %1980 = vmatpush1.msra.mxu0 0.0
        %1981 = vmatprep.subr.mxu0 0.0
        %1982 = vmatpush1.msra.mxu0 0.0
        %1983 = vmatprep.subr.mxu0 0.0
        %1984 = vmatpush1.msra.mxu0 0.0
        %1985 = vmatprep.subr.mxu0 0.0
        %1986 = vmatpush1.msra.mxu0 0.0
        %1987 = vmatprep.subr.mxu0 0.0
        %1988 = vmatpush1.msra.mxu0 0.0
        %1989 = vmatprep.subr.mxu0 0.0
        %1990 = vmatpush1.msra.mxu0 0.0
        %1991 = vmatprep.subr.mxu0 0.0
        %1992 = vmatpush1.msra.mxu0 0.0
        %1993 = vmatprep.subr.mxu0 0.0
        %1994 = vmatpush1.msra.mxu0 0.0
        %1995 = vmatprep.subr.mxu0 0.0
        %1996 = vmatpush1.msra.mxu0 0.0
        %1997 = vmatprep.subr.mxu0 0.0
        %1998 = vmatpush1.msra.mxu0 0.0
        %1999 = vmatprep.subr.mxu0 0.0
        %2000 = vmatpush1.msra.mxu0 0.0
        %2001 = vmatprep.subr.mxu0 0.0
        %2002 = vmatpush1.msra.mxu0 0.0
        %2003 = vmatprep.subr.mxu0 0.0
        %2004 = vmatpush1.msra.mxu0 0.0
        %2005 = vmatprep.subr.mxu0 0.0
        %2006 = vmatpush1.msra.mxu0 0.0
        %2007 = vmatprep.subr.mxu0 0.0
        %2008 = vmatpush1.msra.mxu0 0.0
        %2009 = vmatprep.subr.mxu0 0.0
        %2010 = vmatpush1.msra.mxu0 0.0
        %2011 = vmatprep.subr.mxu0 0.0
        %2012 = vmatpush1.msra.mxu0 0.0
        %2013 = vmatprep.subr.mxu0 0.0
        %2014 = vmatpush1.msra.mxu0 0.0
        %2015 = vmatprep.subr.mxu0 0.0
        %2016 = vmatpush1.msra.mxu0 0.0
        %2017 = vmatprep.mubr.f32.mxu0 0.0
        %2018 = vmatmul.mubr.f32.gmra.mrb[0].mxu0 %v1948
        %v2019 = vpop.f32.mrb[0].mxu0
        %v2020 = vadd.f32 %v1939, %v2019
        %v2021 = vpop.f32.mrb[0].mxu0
        %v2022 = vadd.f32 %v1939, %v2021
        %2023 = vmatprep.mubr.f32.mxu0 0.0
        %2024 = vmatmul.mubr.f32.gmra.mrb[0].mxu0 %v1951
        %v2025 = vpop.f32.mrb[0].mxu0
        %v2026 = vadd.f32 %v1944, %v2025
        %v2027 = vpop.f32.mrb[0].mxu0
        %v2028 = vadd.f32 %v1944, %v2027
        %2029 = vdwg.mxu0
        %2030 = vmatprep.subr.mxu0 %v1919
        %2031 = vmatpush1.msra.mxu0 %v1918
        %2032 = vmatprep.subr.mxu0 %v1927
        %2033 = vmatpush1.msra.mxu0 %v1926
        %2034 = vmatprep.subr.mxu0 0.0
        %2035 = vmatpush1.msra.mxu0 0.0
        %2036 = vmatprep.subr.mxu0 0.0
        %2037 = vmatpush1.msra.mxu0 0.0
        %2038 = vmatprep.subr.mxu0 0.0
        %2039 = vmatpush1.msra.mxu0 0.0
        %2040 = vmatprep.subr.mxu0 0.0
        %2041 = vmatpush1.msra.mxu0 0.0
        %2042 = vmatprep.subr.mxu0 0.0
        %2043 = vmatpush1.msra.mxu0 0.0
        %2044 = vmatprep.subr.mxu0 0.0
        %2045 = vmatpush1.msra.mxu0 0.0
        %2046 = vmatprep.subr.mxu0 0.0
        %2047 = vmatpush1.msra.mxu0 0.0
        %2048 = vmatprep.subr.mxu0 0.0
        %2049 = vmatpush1.msra.mxu0 0.0
        %2050 = vmatprep.subr.mxu0 0.0
        %2051 = vmatpush1.msra.mxu0 0.0
        %2052 = vmatprep.subr.mxu0 0.0
        %2053 = vmatpush1.msra.mxu0 0.0
        %2054 = vmatprep.subr.mxu0 0.0
        %2055 = vmatpush1.msra.mxu0 0.0
        %2056 = vmatprep.subr.mxu0 0.0
        %2057 = vmatpush1.msra.mxu0 0.0
        %2058 = vmatprep.subr.mxu0 0.0
        %2059 = vmatpush1.msra.mxu0 0.0
        %2060 = vmatprep.subr.mxu0 0.0
        %2061 = vmatpush1.msra.mxu0 0.0
        %2062 = vmatprep.subr.mxu0 0.0
        %2063 = vmatpush1.msra.mxu0 0.0
        %2064 = vmatprep.subr.mxu0 0.0
        %2065 = vmatpush1.msra.mxu0 0.0
        %2066 = vmatprep.subr.mxu0 0.0
        %2067 = vmatpush1.msra.mxu0 0.0
        %2068 = vmatprep.subr.mxu0 0.0
        %2069 = vmatpush1.msra.mxu0 0.0
        %2070 = vmatprep.subr.mxu0 0.0
        %2071 = vmatpush1.msra.mxu0 0.0
        %2072 = vmatprep.subr.mxu0 0.0
        %2073 = vmatpush1.msra.mxu0 0.0
        %2074 = vmatprep.subr.mxu0 0.0
        %2075 = vmatpush1.msra.mxu0 0.0
        %2076 = vmatprep.subr.mxu0 0.0
        %2077 = vmatpush1.msra.mxu0 0.0
        %2078 = vmatprep.subr.mxu0 0.0
        %2079 = vmatpush1.msra.mxu0 0.0
        %2080 = vmatprep.subr.mxu0 0.0
        %2081 = vmatpush1.msra.mxu0 0.0
        %2082 = vmatprep.subr.mxu0 0.0
        %2083 = vmatpush1.msra.mxu0 0.0
        %2084 = vmatprep.subr.mxu0 0.0
        %2085 = vmatpush1.msra.mxu0 0.0
        %2086 = vmatprep.subr.mxu0 0.0
        %2087 = vmatpush1.msra.mxu0 0.0
        %2088 = vmatprep.subr.mxu0 0.0
        %2089 = vmatpush1.msra.mxu0 0.0
        %2090 = vmatprep.subr.mxu0 0.0
        %2091 = vmatpush1.msra.mxu0 0.0
        %2092 = vmatprep.subr.mxu0 0.0
        %2093 = vmatpush1.msra.mxu0 0.0
        %2094 = vmatprep.mubr.f32.mxu0 0.0
        %2095 = vmatmul.mubr.f32.gmra.mrb[0].mxu0 %v1948
        %v2096 = vpop.f32.mrb[0].mxu0
        %v2097 = vadd.f32 %v1939, %v2096
        %v2098 = vpop.f32.mrb[0].mxu0
        %v2099 = vadd.f32 %v1939, %v2098
        %2100 = vmatprep.mubr.f32.mxu0 0.0
        %2101 = vmatmul.mubr.f32.gmra.mrb[0].mxu0 %v1951
        %v2102 = vpop.f32.mrb[0].mxu0
        %v2103 = vadd.f32 %v1944, %v2102
        %v2104 = vpop.f32.mrb[0].mxu0
        %v2105 = vadd.f32 %v1944, %v2104
        %2106 = vdwg.mxu0
        %2107 = vmatprep.subr.mxu0 %v1921
        %2108 = vmatpush1.msra.mxu0 %v1920
        %2109 = vmatprep.subr.mxu0 %v1929
        %2110 = vmatpush1.msra.mxu0 %v1928
        %2111 = vmatprep.subr.mxu0 0.0
        %2112 = vmatpush1.msra.mxu0 0.0
        %2113 = vmatprep.subr.mxu0 0.0
        %2114 = vmatpush1.msra.mxu0 0.0
        %2115 = vmatprep.subr.mxu0 0.0
        %2116 = vmatpush1.msra.mxu0 0.0
        %2117 = vmatprep.subr.mxu0 0.0
        %2118 = vmatpush1.msra.mxu0 0.0
        %2119 = vmatprep.subr.mxu0 0.0
        %2120 = vmatpush1.msra.mxu0 0.0
        %2121 = vmatprep.subr.mxu0 0.0
        %2122 = vmatpush1.msra.mxu0 0.0
        %2123 = vmatprep.subr.mxu0 0.0
        %2124 = vmatpush1.msra.mxu0 0.0
        %2125 = vmatprep.subr.mxu0 0.0
        %2126 = vmatpush1.msra.mxu0 0.0
        %2127 = vmatprep.subr.mxu0 0.0
        %2128 = vmatpush1.msra.mxu0 0.0
        %2129 = vmatprep.subr.mxu0 0.0
        %2130 = vmatpush1.msra.mxu0 0.0
        %2131 = vmatprep.subr.mxu0 0.0
        %2132 = vmatpush1.msra.mxu0 0.0
        %2133 = vmatprep.subr.mxu0 0.0
        %2134 = vmatpush1.msra.mxu0 0.0
        %2135 = vmatprep.subr.mxu0 0.0
        %2136 = vmatpush1.msra.mxu0 0.0
        %2137 = vmatprep.subr.mxu0 0.0
        %2138 = vmatpush1.msra.mxu0 0.0
        %2139 = vmatprep.subr.mxu0 0.0
        %2140 = vmatpush1.msra.mxu0 0.0
        %2141 = vmatprep.subr.mxu0 0.0
        %2142 = vmatpush1.msra.mxu0 0.0
        %2143 = vmatprep.subr.mxu0 0.0
        %2144 = vmatpush1.msra.mxu0 0.0
        %2145 = vmatprep.subr.mxu0 0.0
        %2146 = vmatpush1.msra.mxu0 0.0
        %2147 = vmatprep.subr.mxu0 0.0
        %2148 = vmatpush1.msra.mxu0 0.0
        %2149 = vmatprep.subr.mxu0 0.0
        %2150 = vmatpush1.msra.mxu0 0.0
        %2151 = vmatprep.subr.mxu0 0.0
        %2152 = vmatpush1.msra.mxu0 0.0
        %2153 = vmatprep.subr.mxu0 0.0
        %2154 = vmatpush1.msra.mxu0 0.0
        %2155 = vmatprep.subr.mxu0 0.0
        %2156 = vmatpush1.msra.mxu0 0.0
        %2157 = vmatprep.subr.mxu0 0.0
        %2158 = vmatpush1.msra.mxu0 0.0
        %2159 = vmatprep.subr.mxu0 0.0
        %2160 = vmatpush1.msra.mxu0 0.0
        %2161 = vmatprep.subr.mxu0 0.0
        %2162 = vmatpush1.msra.mxu0 0.0
        %2163 = vmatprep.subr.mxu0 0.0
        %2164 = vmatpush1.msra.mxu0 0.0
        %2165 = vmatprep.subr.mxu0 0.0
        %2166 = vmatpush1.msra.mxu0 0.0
        %2167 = vmatprep.subr.mxu0 0.0
        %2168 = vmatpush1.msra.mxu0 0.0
        %2169 = vmatprep.subr.mxu0 0.0
        %2170 = vmatpush1.msra.mxu0 0.0
        %2171 = vmatprep.mubr.f32.mxu0 0.0
        %2172 = vmatmul.mubr.f32.gmra.mrb[0].mxu0 %v1948
        %v2173 = vpop.f32.mrb[0].mxu0
        %v2174 = vadd.f32 %v1939, %v2173
        %v2175 = vpop.f32.mrb[0].mxu0
        %v2176 = vadd.f32 %v1939, %v2175
        %2177 = vmatprep.mubr.f32.mxu0 0.0
        %2178 = vmatmul.mubr.f32.gmra.mrb[0].mxu0 %v1951
        %v2179 = vpop.f32.mrb[0].mxu0
        %v2180 = vadd.f32 %v1944, %v2179
        %v2181 = vpop.f32.mrb[0].mxu0
        %v2182 = vadd.f32 %v1944, %v2181
        %2183 = vdwg.mxu0
        %2184 = vmatprep.subr.mxu0 %v1923
        %2185 = vmatpush1.msra.mxu0 %v1922
        %2186 = vmatprep.subr.mxu0 %v1931
        %2187 = vmatpush1.msra.mxu0 %v1930
        %2188 = vmatprep.subr.mxu0 0.0
        %2189 = vmatpush1.msra.mxu0 0.0
        %2190 = vmatprep.subr.mxu0 0.0
        %2191 = vmatpush1.msra.mxu0 0.0
        %2192 = vmatprep.subr.mxu0 0.0
        %2193 = vmatpush1.msra.mxu0 0.0
        %2194 = vmatprep.subr.mxu0 0.0
        %2195 = vmatpush1.msra.mxu0 0.0
        %2196 = vmatprep.subr.mxu0 0.0
        %2197 = vmatpush1.msra.mxu0 0.0
        %2198 = vmatprep.subr.mxu0 0.0
        %2199 = vmatpush1.msra.mxu0 0.0
        %2200 = vmatprep.subr.mxu0 0.0
        %2201 = vmatpush1.msra.mxu0 0.0
        %2202 = vmatprep.subr.mxu0 0.0
        %2203 = vmatpush1.msra.mxu0 0.0
        %2204 = vmatprep.subr.mxu0 0.0
        %2205 = vmatpush1.msra.mxu0 0.0
        %2206 = vmatprep.subr.mxu0 0.0
        %2207 = vmatpush1.msra.mxu0 0.0
        %2208 = vmatprep.subr.mxu0 0.0
        %2209 = vmatpush1.msra.mxu0 0.0
        %2210 = vmatprep.subr.mxu0 0.0
        %2211 = vmatpush1.msra.mxu0 0.0
        %2212 = vmatprep.subr.mxu0 0.0
        %2213 = vmatpush1.msra.mxu0 0.0
        %2214 = vmatprep.subr.mxu0 0.0
        %2215 = vmatpush1.msra.mxu0 0.0
        %2216 = vmatprep.subr.mxu0 0.0
        %2217 = vmatpush1.msra.mxu0 0.0
        %2218 = vmatprep.subr.mxu0 0.0
        %2219 = vmatpush1.msra.mxu0 0.0
        %2220 = vmatprep.subr.mxu0 0.0
        %2221 = vmatpush1.msra.mxu0 0.0
        %2222 = vmatprep.subr.mxu0 0.0
        %2223 = vmatpush1.msra.mxu0 0.0
        %2224 = vmatprep.subr.mxu0 0.0
        %2225 = vmatpush1.msra.mxu0 0.0
        %2226 = vmatprep.subr.mxu0 0.0
        %2227 = vmatpush1.msra.mxu0 0.0
        %2228 = vmatprep.subr.mxu0 0.0
        %2229 = vmatpush1.msra.mxu0 0.0
        %2230 = vmatprep.subr.mxu0 0.0
        %2231 = vmatpush1.msra.mxu0 0.0
        %2232 = vmatprep.subr.mxu0 0.0
        %2233 = vmatpush1.msra.mxu0 0.0
        %2234 = vmatprep.subr.mxu0 0.0
        %2235 = vmatpush1.msra.mxu0 0.0
        %2236 = vmatprep.subr.mxu0 0.0
        %2237 = vmatpush1.msra.mxu0 0.0
        %2238 = vmatprep.subr.mxu0 0.0
        %2239 = vmatpush1.msra.mxu0 0.0
        %2240 = vmatprep.subr.mxu0 0.0
        %2241 = vmatpush1.msra.mxu0 0.0
        %2242 = vmatprep.subr.mxu0 0.0
        %2243 = vmatpush1.msra.mxu0 0.0
        %2244 = vmatprep.subr.mxu0 0.0
        %2245 = vmatpush1.msra.mxu0 0.0
        %2246 = vmatprep.subr.mxu0 0.0
        %2247 = vmatpush1.msra.mxu0 0.0
        %2248 = vmatprep.mubr.f32.mxu0 0.0
        %2249 = vmatmul.mubr.f32.gmra.mrb[0].mxu0 %v1948
        %v2250 = vpop.f32.mrb[0].mxu0
        %v2251 = vadd.f32 %v1939, %v2250
        %v2252 = vpop.f32.mrb[0].mxu0
        %v2253 = vadd.f32 %v1939, %v2252
        %2254 = vmatprep.mubr.f32.mxu0 0.0
        %2255 = vmatmul.mubr.f32.gmra.mrb[0].mxu0 %v1951
        %v2256 = vpop.f32.mrb[0].mxu0
        %v2257 = vadd.f32 %v1944, %v2256
        %v2258 = vpop.f32.mrb[0].mxu0
        %v2259 = vadd.f32 %v1944, %v2258
        %2260 = vdwg.mxu0
        %v2261 = vmax.f32 %v2020, 0.0
        %v2262 = vmax.f32 %v2022, 0.0
        %v2263 = vmax.f32 %v2097, 0.0
        %v2264 = vmax.f32 %v2099, 0.0
        %v2265 = vmax.f32 %v2174, 0.0
        %v2266 = vmax.f32 %v2176, 0.0
        %v2267 = vmax.f32 %v2251, 0.0
        %v2268 = vmax.f32 %v2253, 0.0
        %v2269 = vmax.f32 %v2026, 0.0
        %v2270 = vmax.f32 %v2028, 0.0
        %v2271 = vmax.f32 %v2103, 0.0
        %v2272 = vmax.f32 %v2105, 0.0
        %v2273 = vmax.f32 %v2180, 0.0
        %v2274 = vmax.f32 %v2182, 0.0
        %v2275 = vmax.f32 %v2257, 0.0
        %v2276 = vmax.f32 %v2259, 0.0
        %v2277 = vld [vmem:[%s433] sm:$0xff]
        %v2278 = vld [vmem:[%s433 + $0x8] sm:$0xff]
        %2279 = vmatprep.subr.mxu0 %v506
        %2280 = vmatpush1.msra.mxu0 %v505
        %2281 = vmatprep.subr.mxu0 %v514
        %2282 = vmatpush1.msra.mxu0 %v513
        %2283 = vmatprep.subr.mxu0 %v522
        %2284 = vmatpush1.msra.mxu0 %v521
        %2285 = vmatprep.subr.mxu0 %v530
        %2286 = vmatpush1.msra.mxu0 %v529
        %2287 = vmatprep.subr.mxu0 %v538
        %2288 = vmatpush1.msra.mxu0 %v537
        %2289 = vmatprep.subr.mxu0 %v546
        %2290 = vmatpush1.msra.mxu0 %v545
        %2291 = vmatprep.subr.mxu0 %v554
        %2292 = vmatpush1.msra.mxu0 %v553
        %2293 = vmatprep.subr.mxu0 %v562
        %2294 = vmatpush1.msra.mxu0 %v561
        %2295 = vmatprep.subr.mxu0 %v570
        %2296 = vmatpush1.msra.mxu0 %v569
        %2297 = vmatprep.subr.mxu0 %v578
        %2298 = vmatpush1.msra.mxu0 %v577
        %2299 = vmatprep.subr.mxu0 %v586
        %2300 = vmatpush1.msra.mxu0 %v585
        %2301 = vmatprep.subr.mxu0 %v594
        %2302 = vmatpush1.msra.mxu0 %v593
        %2303 = vmatprep.subr.mxu0 %v602
        %2304 = vmatpush1.msra.mxu0 %v601
        %2305 = vmatprep.subr.mxu0 %v610
        %2306 = vmatpush1.msra.mxu0 %v609
        %2307 = vmatprep.subr.mxu0 %v618
        %2308 = vmatpush1.msra.mxu0 %v617
        %2309 = vmatprep.subr.mxu0 %v626
        %2310 = vmatpush1.msra.mxu0 %v625
        %2311 = vmatprep.subr.mxu0 0.0
        %2312 = vmatpush1.msra.mxu0 0.0
        %2313 = vmatprep.subr.mxu0 0.0
        %2314 = vmatpush1.msra.mxu0 0.0
        %2315 = vmatprep.subr.mxu0 0.0
        %2316 = vmatpush1.msra.mxu0 0.0
        %2317 = vmatprep.subr.mxu0 0.0
        %2318 = vmatpush1.msra.mxu0 0.0
        %2319 = vmatprep.subr.mxu0 0.0
        %2320 = vmatpush1.msra.mxu0 0.0
        %2321 = vmatprep.subr.mxu0 0.0
        %2322 = vmatpush1.msra.mxu0 0.0
        %2323 = vmatprep.subr.mxu0 0.0
        %2324 = vmatpush1.msra.mxu0 0.0
        %2325 = vmatprep.subr.mxu0 0.0
        %2326 = vmatpush1.msra.mxu0 0.0
        %2327 = vmatprep.subr.mxu0 0.0
        %2328 = vmatpush1.msra.mxu0 0.0
        %2329 = vmatprep.subr.mxu0 0.0
        %2330 = vmatpush1.msra.mxu0 0.0
        %2331 = vmatprep.subr.mxu0 0.0
        %2332 = vmatpush1.msra.mxu0 0.0
        %2333 = vmatprep.subr.mxu0 0.0
        %2334 = vmatpush1.msra.mxu0 0.0
        %2335 = vmatprep.subr.mxu0 0.0
        %2336 = vmatpush1.msra.mxu0 0.0
        %2337 = vmatprep.subr.mxu0 0.0
        %2338 = vmatpush1.msra.mxu0 0.0
        %2339 = vmatprep.subr.mxu0 0.0
        %2340 = vmatpush1.msra.mxu0 0.0
        %2341 = vmatprep.subr.mxu0 0.0
        %2342 = vmatpush1.msra.mxu0 0.0
        %2343 = vmatprep.mubr.f32.mxu0 0.0
        %2344 = vmatmul.mubr.f32.gmra.mrb[0].mxu0 %v2277
        %v2345 = vpop.f32.mrb[0].mxu0
        %v2346 = vadd.f32 0.0, %v2345
        %v2347 = vpop.f32.mrb[0].mxu0
        %v2348 = vadd.f32 0.0, %v2347
        %2349 = vmatprep.mubr.f32.mxu0 0.0
        %2350 = vmatmul.mubr.f32.gmra.mrb[0].mxu0 %v2278
        %v2351 = vpop.f32.mrb[0].mxu0
        %v2352 = vadd.f32 0.0, %v2351
        %v2353 = vpop.f32.mrb[0].mxu0
        %v2354 = vadd.f32 0.0, %v2353
        %2355 = vdwg.mxu0
        %2356 = vmatprep.subr.mxu0 %v508
        %2357 = vmatpush1.msra.mxu0 %v507
        %2358 = vmatprep.subr.mxu0 %v516
        %2359 = vmatpush1.msra.mxu0 %v515
        %2360 = vmatprep.subr.mxu0 %v524
        %2361 = vmatpush1.msra.mxu0 %v523
        %2362 = vmatprep.subr.mxu0 %v532
        %2363 = vmatpush1.msra.mxu0 %v531
        %2364 = vmatprep.subr.mxu0 %v540
        %2365 = vmatpush1.msra.mxu0 %v539
        %2366 = vmatprep.subr.mxu0 %v548
        %2367 = vmatpush1.msra.mxu0 %v547
        %2368 = vmatprep.subr.mxu0 %v556
        %2369 = vmatpush1.msra.mxu0 %v555
        %2370 = vmatprep.subr.mxu0 %v564
        %2371 = vmatpush1.msra.mxu0 %v563
        %2372 = vmatprep.subr.mxu0 %v572
        %2373 = vmatpush1.msra.mxu0 %v571
        %2374 = vmatprep.subr.mxu0 %v580
        %2375 = vmatpush1.msra.mxu0 %v579
        %2376 = vmatprep.subr.mxu0 %v588
        %2377 = vmatpush1.msra.mxu0 %v587
        %2378 = vmatprep.subr.mxu0 %v596
        %2379 = vmatpush1.msra.mxu0 %v595
        %2380 = vmatprep.subr.mxu0 %v604
        %2381 = vmatpush1.msra.mxu0 %v603
        %2382 = vmatprep.subr.mxu0 %v612
        %2383 = vmatpush1.msra.mxu0 %v611
        %2384 = vmatprep.subr.mxu0 %v620
        %2385 = vmatpush1.msra.mxu0 %v619
        %2386 = vmatprep.subr.mxu0 %v628
        %2387 = vmatpush1.msra.mxu0 %v627
        %2388 = vmatprep.subr.mxu0 0.0
        %2389 = vmatpush1.msra.mxu0 0.0
        %2390 = vmatprep.subr.mxu0 0.0
        %2391 = vmatpush1.msra.mxu0 0.0
        %2392 = vmatprep.subr.mxu0 0.0
        %2393 = vmatpush1.msra.mxu0 0.0
        %2394 = vmatprep.subr.mxu0 0.0
        %2395 = vmatpush1.msra.mxu0 0.0
        %2396 = vmatprep.subr.mxu0 0.0
        %2397 = vmatpush1.msra.mxu0 0.0
        %2398 = vmatprep.subr.mxu0 0.0
        %2399 = vmatpush1.msra.mxu0 0.0
        %2400 = vmatprep.subr.mxu0 0.0
        %2401 = vmatpush1.msra.mxu0 0.0
        %2402 = vmatprep.subr.mxu0 0.0
        %2403 = vmatpush1.msra.mxu0 0.0
        %2404 = vmatprep.subr.mxu0 0.0
        %2405 = vmatpush1.msra.mxu0 0.0
        %2406 = vmatprep.subr.mxu0 0.0
        %2407 = vmatpush1.msra.mxu0 0.0
        %2408 = vmatprep.subr.mxu0 0.0
        %2409 = vmatpush1.msra.mxu0 0.0
        %2410 = vmatprep.subr.mxu0 0.0
        %2411 = vmatpush1.msra.mxu0 0.0
        %2412 = vmatprep.subr.mxu0 0.0
        %2413 = vmatpush1.msra.mxu0 0.0
        %2414 = vmatprep.subr.mxu0 0.0
        %2415 = vmatpush1.msra.mxu0 0.0
        %2416 = vmatprep.subr.mxu0 0.0
        %2417 = vmatpush1.msra.mxu0 0.0
        %2418 = vmatprep.subr.mxu0 0.0
        %2419 = vmatpush1.msra.mxu0 0.0
        %2420 = vmatprep.mubr.f32.mxu0 0.0
        %2421 = vmatmul.mubr.f32.gmra.mrb[0].mxu0 %v2277
        %v2422 = vpop.f32.mrb[0].mxu0
        %v2423 = vadd.f32 0.0, %v2422
        %v2424 = vpop.f32.mrb[0].mxu0
        %v2425 = vadd.f32 0.0, %v2424
        %2426 = vmatprep.mubr.f32.mxu0 0.0
        %2427 = vmatmul.mubr.f32.gmra.mrb[0].mxu0 %v2278
        %v2428 = vpop.f32.mrb[0].mxu0
        %v2429 = vadd.f32 0.0, %v2428
        %v2430 = vpop.f32.mrb[0].mxu0
        %v2431 = vadd.f32 0.0, %v2430
        %2432 = vdwg.mxu0
        %2433 = vmatprep.subr.mxu0 %v510
        %2434 = vmatpush1.msra.mxu0 %v509
        %2435 = vmatprep.subr.mxu0 %v518
        %2436 = vmatpush1.msra.mxu0 %v517
        %2437 = vmatprep.subr.mxu0 %v526
        %2438 = vmatpush1.msra.mxu0 %v525
        %2439 = vmatprep.subr.mxu0 %v534
        %2440 = vmatpush1.msra.mxu0 %v533
        %2441 = vmatprep.subr.mxu0 %v542
        %2442 = vmatpush1.msra.mxu0 %v541
        %2443 = vmatprep.subr.mxu0 %v550
        %2444 = vmatpush1.msra.mxu0 %v549
        %2445 = vmatprep.subr.mxu0 %v558
        %2446 = vmatpush1.msra.mxu0 %v557
        %2447 = vmatprep.subr.mxu0 %v566
        %2448 = vmatpush1.msra.mxu0 %v565
        %2449 = vmatprep.subr.mxu0 %v574
        %2450 = vmatpush1.msra.mxu0 %v573
        %2451 = vmatprep.subr.mxu0 %v582
        %2452 = vmatpush1.msra.mxu0 %v581
        %2453 = vmatprep.subr.mxu0 %v590
        %2454 = vmatpush1.msra.mxu0 %v589
        %2455 = vmatprep.subr.mxu0 %v598
        %2456 = vmatpush1.msra.mxu0 %v597
        %2457 = vmatprep.subr.mxu0 %v606
        %2458 = vmatpush1.msra.mxu0 %v605
        %2459 = vmatprep.subr.mxu0 %v614
        %2460 = vmatpush1.msra.mxu0 %v613
        %2461 = vmatprep.subr.mxu0 %v622
        %2462 = vmatpush1.msra.mxu0 %v621
        %2463 = vmatprep.subr.mxu0 %v630
        %2464 = vmatpush1.msra.mxu0 %v629
        %2465 = vmatprep.subr.mxu0 0.0
        %2466 = vmatpush1.msra.mxu0 0.0
        %2467 = vmatprep.subr.mxu0 0.0
        %2468 = vmatpush1.msra.mxu0 0.0
        %2469 = vmatprep.subr.mxu0 0.0
        %2470 = vmatpush1.msra.mxu0 0.0
        %2471 = vmatprep.subr.mxu0 0.0
        %2472 = vmatpush1.msra.mxu0 0.0
        %2473 = vmatprep.subr.mxu0 0.0
        %2474 = vmatpush1.msra.mxu0 0.0
        %2475 = vmatprep.subr.mxu0 0.0
        %2476 = vmatpush1.msra.mxu0 0.0
        %2477 = vmatprep.subr.mxu0 0.0
        %2478 = vmatpush1.msra.mxu0 0.0
        %2479 = vmatprep.subr.mxu0 0.0
        %2480 = vmatpush1.msra.mxu0 0.0
        %2481 = vmatprep.subr.mxu0 0.0
        %2482 = vmatpush1.msra.mxu0 0.0
        %2483 = vmatprep.subr.mxu0 0.0
        %2484 = vmatpush1.msra.mxu0 0.0
        %2485 = vmatprep.subr.mxu0 0.0
        %2486 = vmatpush1.msra.mxu0 0.0
        %2487 = vmatprep.subr.mxu0 0.0
        %2488 = vmatpush1.msra.mxu0 0.0
        %2489 = vmatprep.subr.mxu0 0.0
        %2490 = vmatpush1.msra.mxu0 0.0
        %2491 = vmatprep.subr.mxu0 0.0
        %2492 = vmatpush1.msra.mxu0 0.0
        %2493 = vmatprep.subr.mxu0 0.0
        %2494 = vmatpush1.msra.mxu0 0.0
        %2495 = vmatprep.subr.mxu0 0.0
        %2496 = vmatpush1.msra.mxu0 0.0
        %2497 = vmatprep.mubr.f32.mxu0 0.0
        %2498 = vmatmul.mubr.f32.gmra.mrb[0].mxu0 %v2277
        %v2499 = vpop.f32.mrb[0].mxu0
        %v2500 = vadd.f32 0.0, %v2499
        %v2501 = vpop.f32.mrb[0].mxu0
        %v2502 = vadd.f32 0.0, %v2501
        %2503 = vmatprep.mubr.f32.mxu0 0.0
        %2504 = vmatmul.mubr.f32.gmra.mrb[0].mxu0 %v2278
        %v2505 = vpop.f32.mrb[0].mxu0
        %v2506 = vadd.f32 0.0, %v2505
        %v2507 = vpop.f32.mrb[0].mxu0
        %v2508 = vadd.f32 0.0, %v2507
        %2509 = vdwg.mxu0
        %2510 = vmatprep.subr.mxu0 %v512
        %2511 = vmatpush1.msra.mxu0 %v511
        %2512 = vmatprep.subr.mxu0 %v520
        %2513 = vmatpush1.msra.mxu0 %v519
        %2514 = vmatprep.subr.mxu0 %v528
        %2515 = vmatpush1.msra.mxu0 %v527
        %2516 = vmatprep.subr.mxu0 %v536
        %2517 = vmatpush1.msra.mxu0 %v535
        %2518 = vmatprep.subr.mxu0 %v544
        %2519 = vmatpush1.msra.mxu0 %v543
        %2520 = vmatprep.subr.mxu0 %v552
        %2521 = vmatpush1.msra.mxu0 %v551
        %2522 = vmatprep.subr.mxu0 %v560
        %2523 = vmatpush1.msra.mxu0 %v559
        %2524 = vmatprep.subr.mxu0 %v568
        %2525 = vmatpush1.msra.mxu0 %v567
        %2526 = vmatprep.subr.mxu0 %v576
        %2527 = vmatpush1.msra.mxu0 %v575
        %2528 = vmatprep.subr.mxu0 %v584
        %2529 = vmatpush1.msra.mxu0 %v583
        %2530 = vmatprep.subr.mxu0 %v592
        %2531 = vmatpush1.msra.mxu0 %v591
        %2532 = vmatprep.subr.mxu0 %v600
        %2533 = vmatpush1.msra.mxu0 %v599
        %2534 = vmatprep.subr.mxu0 %v608
        %2535 = vmatpush1.msra.mxu0 %v607
        %2536 = vmatprep.subr.mxu0 %v616
        %2537 = vmatpush1.msra.mxu0 %v615
        %2538 = vmatprep.subr.mxu0 %v624
        %2539 = vmatpush1.msra.mxu0 %v623
        %2540 = vmatprep.subr.mxu0 %v632
        %2541 = vmatpush1.msra.mxu0 %v631
        %2542 = vmatprep.subr.mxu0 0.0
        %2543 = vmatpush1.msra.mxu0 0.0
        %2544 = vmatprep.subr.mxu0 0.0
        %2545 = vmatpush1.msra.mxu0 0.0
        %2546 = vmatprep.subr.mxu0 0.0
        %2547 = vmatpush1.msra.mxu0 0.0
        %2548 = vmatprep.subr.mxu0 0.0
        %2549 = vmatpush1.msra.mxu0 0.0
        %2550 = vmatprep.subr.mxu0 0.0
        %2551 = vmatpush1.msra.mxu0 0.0
        %2552 = vmatprep.subr.mxu0 0.0
        %2553 = vmatpush1.msra.mxu0 0.0
        %2554 = vmatprep.subr.mxu0 0.0
        %2555 = vmatpush1.msra.mxu0 0.0
        %2556 = vmatprep.subr.mxu0 0.0
        %2557 = vmatpush1.msra.mxu0 0.0
        %2558 = vmatprep.subr.mxu0 0.0
        %2559 = vmatpush1.msra.mxu0 0.0
        %2560 = vmatprep.subr.mxu0 0.0
        %2561 = vmatpush1.msra.mxu0 0.0
        %2562 = vmatprep.subr.mxu0 0.0
        %2563 = vmatpush1.msra.mxu0 0.0
        %2564 = vmatprep.subr.mxu0 0.0
        %2565 = vmatpush1.msra.mxu0 0.0
        %2566 = vmatprep.subr.mxu0 0.0
        %2567 = vmatpush1.msra.mxu0 0.0
        %2568 = vmatprep.subr.mxu0 0.0
        %2569 = vmatpush1.msra.mxu0 0.0
        %2570 = vmatprep.subr.mxu0 0.0
        %2571 = vmatpush1.msra.mxu0 0.0
        %2572 = vmatprep.subr.mxu0 0.0
        %2573 = vmatpush1.msra.mxu0 0.0
        %2574 = vmatprep.mubr.f32.mxu0 0.0
        %2575 = vmatmul.mubr.f32.gmra.mrb[0].mxu0 %v2277
        %v2576 = vpop.f32.mrb[0].mxu0
        %v2577 = vadd.f32 0.0, %v2576
        %v2578 = vpop.f32.mrb[0].mxu0
        %v2579 = vadd.f32 0.0, %v2578
        %2580 = vmatprep.mubr.f32.mxu0 0.0
        %2581 = vmatmul.mubr.f32.gmra.mrb[0].mxu0 %v2278
        %v2582 = vpop.f32.mrb[0].mxu0
        %v2583 = vadd.f32 0.0, %v2582
        %v2584 = vpop.f32.mrb[0].mxu0
        %v2585 = vadd.f32 0.0, %v2584
        %2586 = vdwg.mxu0
        %2587 = vst [vmem:[%s485] sm:$0xff] %v2261
        %2588 = vst [vmem:[%s485 + $0x8] sm:$0xff] %v2262
        %2589 = vst [vmem:[%s485 + $0x10] sm:$0xff] %v2263
        %2590 = vst [vmem:[%s485 + $0x18] sm:$0xff] %v2264
        %2591 = vst [vmem:[%s485 + $0x20] sm:$0xff] %v2265
        %2592 = vst [vmem:[%s485 + $0x28] sm:$0xff] %v2266
        %2593 = vst [vmem:[%s485 + $0x30] sm:$0xff] %v2267
        %2594 = vst [vmem:[%s485 + $0x38] sm:$0xff] %v2268
        %2595 = vst [vmem:[%s485 + $0x40] sm:$0xff] %v2269
        %2596 = vst [vmem:[%s485 + $0x48] sm:$0xff] %v2270
        %2597 = vst [vmem:[%s485 + $0x50] sm:$0xff] %v2271
        %2598 = vst [vmem:[%s485 + $0x58] sm:$0xff] %v2272
        %2599 = vst [vmem:[%s485 + $0x60] sm:$0xff] %v2273
        %2600 = vst [vmem:[%s485 + $0x68] sm:$0xff] %v2274
        %2601 = vst [vmem:[%s485 + $0x70] sm:$0xff] %v2275
        %2602 = vst [vmem:[%s485 + $0x78] sm:$0xff] %v2276
        %2603 = vst [vmem:[%s485 + $0x80] sm:$0xff] %v2346
        %2604 = vst [vmem:[%s485 + $0x88] sm:$0xff] %v2348
        %2605 = vst [vmem:[%s485 + $0x90] sm:$0xff] %v2423
        %2606 = vst [vmem:[%s485 + $0x98] sm:$0xff] %v2425
        %2607 = vst [vmem:[%s485 + $0xa0] sm:$0xff] %v2500
        %2608 = vst [vmem:[%s485 + $0xa8] sm:$0xff] %v2502
        %2609 = vst [vmem:[%s485 + $0xb0] sm:$0xff] %v2577
        %2610 = vst [vmem:[%s485 + $0xb8] sm:$0xff] %v2579
        %2611 = vst [vmem:[%s485 + $0xc0] sm:$0xff] %v2352
        %2612 = vst [vmem:[%s485 + $0xc8] sm:$0xff] %v2354
        %2613 = vst [vmem:[%s485 + $0xd0] sm:$0xff] %v2429
        %2614 = vst [vmem:[%s485 + $0xd8] sm:$0xff] %v2431
        %2615 = vst [vmem:[%s485 + $0xe0] sm:$0xff] %v2506
        %2616 = vst [vmem:[%s485 + $0xe8] sm:$0xff] %v2508
        %2617 = vst [vmem:[%s485 + $0xf0] sm:$0xff] %v2583
        %2618 = vst [vmem:[%s485 + $0xf8] sm:$0xff] %v2585
        %s2619 = sand.u32 %s296, 1
        %s2620 = sand.u32 %s296, 1
        %s2621 = smul.addr %s2620, 256
        %s2622 = scalar_lea.vmem [#allocation3], %s2621
        // Predicated region
        $region103: #{local_spatial_encoding.1} parent=97 // pred_check
          %p2623 = pneg %p306
        $region104: #{local_spatial_encoding.1} parent=97 // pred_check_branch
          %2625 = sbr.rel (%p2623) target = $region106
        $region105: #{local_spatial_encoding.1} parent=97 // pred_region
          %s2626 = smul.u32 8, %s27
          %s2627 = smul.addr %s26, 64
          %s2628 = sadd.s32 %s2626, %s2627
          %s2629 = smul.addr %s2628, 8
          %s2630 = scalar_lea.vmem %s11, %s2629
          // Predicated region
          $region107: #{local_spatial_encoding.1} parent=105 // pred_check
            _
          $region108: #{local_spatial_encoding.1} parent=105 // pred_check_branch
            %2632 = sbr.rel (0) target = $region110
          $region109: #{local_spatial_encoding.1} parent=105 // pred_region
            // Predicated region
            $region111: #{local_spatial_encoding.1} parent=109 // pred_check
              _
            $region112: #{local_spatial_encoding.1} parent=109 // pred_check_branch
              %2634 = sbr.rel (0) target = $region114
            $region113: #{local_spatial_encoding.1} parent=109 // pred_region
              loop: start=0, step=1, limit=1
              $region115: #{local_spatial_encoding.1} parent=113 // loop_pre_header
                _
              $region116: #{local_spatial_encoding.1} parent=113 // loop_header
                %s2636 = sphi 0, %s2640
                %p2637 = scmp.ge.s32.totalorder %s2636, 1
                %s2641 = sphi %s2622, %s2622
                %s2642 = sphi %s2630, %s2630
              $region117: #{local_spatial_encoding.1} parent=113 // loop_header_branch
                %2639 = sbr.rel (%p2637) target = $region121
              $region118: #{local_spatial_encoding.1} parent=113 // loop_body
                %v2643 = vld [vmem:[%s2641] sm:$0xff]
                %2644 = vst [vmem:[%s2642] sm:$0xff] %v2643
                %v2645 = vld [vmem:[%s2641 + $0x8] sm:$0xff]
                %2646 = vst [vmem:[%s2642 + $0x8] sm:$0xff] %v2645
                %v2647 = vld [vmem:[%s2641 + $0x10] sm:$0xff]
                %2648 = vst [vmem:[%s2642 + $0x10] sm:$0xff] %v2647
                %v2649 = vld [vmem:[%s2641 + $0x18] sm:$0xff]
                %2650 = vst [vmem:[%s2642 + $0x18] sm:$0xff] %v2649
                %v2651 = vld [vmem:[%s2641 + $0x20] sm:$0xff]
                %2652 = vst [vmem:[%s2642 + $0x20] sm:$0xff] %v2651
                %v2653 = vld [vmem:[%s2641 + $0x28] sm:$0xff]
                %2654 = vst [vmem:[%s2642 + $0x28] sm:$0xff] %v2653
                %v2655 = vld [vmem:[%s2641 + $0x30] sm:$0xff]
                %2656 = vst [vmem:[%s2642 + $0x30] sm:$0xff] %v2655
                %v2657 = vld [vmem:[%s2641 + $0x38] sm:$0xff]
                %2658 = vst [vmem:[%s2642 + $0x38] sm:$0xff] %v2657
                %v2659 = vld [vmem:[%s2641 + $0x40] sm:$0xff]
                %2660 = vst [vmem:[%s2642 + $0x80] sm:$0xff] %v2659
                %v2661 = vld [vmem:[%s2641 + $0x48] sm:$0xff]
                %2662 = vst [vmem:[%s2642 + $0x88] sm:$0xff] %v2661
                %v2663 = vld [vmem:[%s2641 + $0x50] sm:$0xff]
                %2664 = vst [vmem:[%s2642 + $0x90] sm:$0xff] %v2663
                %v2665 = vld [vmem:[%s2641 + $0x58] sm:$0xff]
                %2666 = vst [vmem:[%s2642 + $0x98] sm:$0xff] %v2665
                %v2667 = vld [vmem:[%s2641 + $0x60] sm:$0xff]
                %2668 = vst [vmem:[%s2642 + $0xa0] sm:$0xff] %v2667
                %v2669 = vld [vmem:[%s2641 + $0x68] sm:$0xff]
                %2670 = vst [vmem:[%s2642 + $0xa8] sm:$0xff] %v2669
                %v2671 = vld [vmem:[%s2641 + $0x70] sm:$0xff]
                %2672 = vst [vmem:[%s2642 + $0xb0] sm:$0xff] %v2671
                %v2673 = vld [vmem:[%s2641 + $0x78] sm:$0xff]
                %2674 = vst [vmem:[%s2642 + $0xb8] sm:$0xff] %v2673
                %v2675 = vld [vmem:[%s2641 + $0x80] sm:$0xff]
                %2676 = vst [vmem:[%s2642 + $0x100] sm:$0xff] %v2675
                %v2677 = vld [vmem:[%s2641 + $0x88] sm:$0xff]
                %2678 = vst [vmem:[%s2642 + $0x108] sm:$0xff] %v2677
                %v2679 = vld [vmem:[%s2641 + $0x90] sm:$0xff]
                %2680 = vst [vmem:[%s2642 + $0x110] sm:$0xff] %v2679
                %v2681 = vld [vmem:[%s2641 + $0x98] sm:$0xff]
                %2682 = vst [vmem:[%s2642 + $0x118] sm:$0xff] %v2681
                %v2683 = vld [vmem:[%s2641 + $0xa0] sm:$0xff]
                %2684 = vst [vmem:[%s2642 + $0x120] sm:$0xff] %v2683
                %v2685 = vld [vmem:[%s2641 + $0xa8] sm:$0xff]
                %2686 = vst [vmem:[%s2642 + $0x128] sm:$0xff] %v2685
                %v2687 = vld [vmem:[%s2641 + $0xb0] sm:$0xff]
                %2688 = vst [vmem:[%s2642 + $0x130] sm:$0xff] %v2687
                %v2689 = vld [vmem:[%s2641 + $0xb8] sm:$0xff]
                %2690 = vst [vmem:[%s2642 + $0x138] sm:$0xff] %v2689
                %v2691 = vld [vmem:[%s2641 + $0xc0] sm:$0xff]
                %2692 = vst [vmem:[%s2642 + $0x180] sm:$0xff] %v2691
                %v2693 = vld [vmem:[%s2641 + $0xc8] sm:$0xff]
                %2694 = vst [vmem:[%s2642 + $0x188] sm:$0xff] %v2693
                %v2695 = vld [vmem:[%s2641 + $0xd0] sm:$0xff]
                %2696 = vst [vmem:[%s2642 + $0x190] sm:$0xff] %v2695
                %v2697 = vld [vmem:[%s2641 + $0xd8] sm:$0xff]
                %2698 = vst [vmem:[%s2642 + $0x198] sm:$0xff] %v2697
                %v2699 = vld [vmem:[%s2641 + $0xe0] sm:$0xff]
                %2700 = vst [vmem:[%s2642 + $0x1a0] sm:$0xff] %v2699
                %v2701 = vld [vmem:[%s2641 + $0xe8] sm:$0xff]
                %2702 = vst [vmem:[%s2642 + $0x1a8] sm:$0xff] %v2701
                %v2703 = vld [vmem:[%s2641 + $0xf0] sm:$0xff]
                %2704 = vst [vmem:[%s2642 + $0x1b0] sm:$0xff] %v2703
                %v2705 = vld [vmem:[%s2641 + $0xf8] sm:$0xff]
                %2706 = vst [vmem:[%s2642 + $0x1b8] sm:$0xff] %v2705
              $region119: #{local_spatial_encoding.1} parent=113 // loop_footer
                %s2640 = sadd.s32 1, %s2636
              $region120: #{local_spatial_encoding.1} parent=113 // loop_footer_branch
                %2635 = sbr.rel target = $region116
              $region121: #{local_spatial_encoding.1} parent=113 // loop_exit
                _
            $region114: #{local_spatial_encoding.1} parent=109 // pred_fallthru
              _
            // Predicated region
            $region122: #{local_spatial_encoding.1} parent=109 // pred_check
              _
            $region123: #{local_spatial_encoding.1} parent=109 // pred_check_branch
              %2708 = sbr.rel target = $region125
            $region124: #{local_spatial_encoding.1} parent=109 // pred_region
              _
            $region125: #{local_spatial_encoding.1} parent=109 // pred_fallthru
              _
          $region110: #{local_spatial_encoding.1} parent=105 // pred_fallthru
            _
          %2709 = vnop
        $region106: #{local_spatial_encoding.1} parent=97 // pred_fallthru
          _
      $region98: #{local_spatial_encoding.1} parent=5 // pred_fallthru
        _
      %p2710 = scmp.le.s32.totalorder 2, %s17
      // Predicated region
      $region126: #{local_spatial_encoding.1} parent=5 // pred_check
        %p2711 = pneg %p2710
      $region127: #{local_spatial_encoding.1} parent=5 // pred_check_branch
        %2713 = sbr.rel (%p2711) target = $region129
      $region128: #{local_spatial_encoding.1} parent=5 // pred_region
        %s2714 = ssub.s32 %s17, 2
        // Predicated region
        $region130: #{local_spatial_encoding.1} parent=128 // pred_check
          %p2715 = pneg %p312
        $region131: #{local_spatial_encoding.1} parent=128 // pred_check_branch
          %2717 = sbr.rel (%p2715) target = $region133
        $region132: #{local_spatial_encoding.1} parent=128 // pred_region
          %s2718 = sand.u32 %s297, 1
          %s2719 = sand.u32 %s297, 1
          %s2720 = smul.addr %s2719, 256
          %s2721 = scalar_lea.vmem [#allocation3], %s2720
        $region133: #{local_spatial_encoding.1} parent=128 // pred_fallthru
          _
      $region129: #{local_spatial_encoding.1} parent=5 // pred_fallthru
        _
    $region6: #{local_spatial_encoding.1} parent=1 // loop_footer
      %s21 = sadd.s32 1, %s17
    $region7: #{local_spatial_encoding.1} parent=1 // loop_footer_branch
      %16 = sbr.rel target = $region3
    $region8: #{local_spatial_encoding.1} parent=1 // loop_exit
      _

</llo_original>
